<compile_context>
chip_gen: v7x
topology: tpu7x:2x2x1
jax: 0.10.0
libtpu: 0.0.40
codegen_flags: <defaults>
</compile_context>

<pallas_src>
import jax
import jax.numpy as jnp
from jax import lax
from jax.experimental import pallas as pl
from jax.experimental.pallas import tpu as pltpu

LANE = 128  # TPU lane width; channel axes are padded to multiples of this.


def _round_up(x, m):
    return (x + m - 1) // m * m


def _largest_divisor_leq(n, cap):
    cap = max(1, min(n, cap))
    for t in range(cap, 0, -1):
        if n % t == 0:
            return t
    return 1


# ---------------------------------------------------------------------------
# Effective 3x3 kernel construction (glue, plain JAX)
# ---------------------------------------------------------------------------

# 3x3 ring positions in clockwise angular order (45-degree steps), center excluded.
_RING = [(0, 0), (0, 1), (0, 2), (1, 2), (2, 2), (2, 1), (2, 0), (1, 0)]


# TODO(synk): the exact ring ordering / tap table lives in the closed-source
# _C.group_conv_forward CUDA kernel; this uses a documented clockwise convention
# (center + cross for "skel", full 3x3 for type 1, center + vertical pair for "bar").
def build_effective_3x3(weight, kernel_type, rotation):
    """weight: (O, I, num_kernel) -> dense (O, I, 3, 3) rotated kernel."""
    k = jnp.zeros(weight.shape[:2] + (3, 3), weight.dtype)
    rot = int(rotation) % 8
    if kernel_type == 1:
        # full 3x3: params are row-major taps; rotate the 8 ring taps by `rot`.
        k = k.at[:, :, 1, 1].set(weight[:, :, 4])
        for p, (r, c) in enumerate(_RING):
            src_idx = r * 3 + c                       # row-major parameter index
            dr, dc = _RING[(p + rot) % 8]
            k = k.at[:, :, dr, dc].set(weight[:, :, src_idx])
    elif kernel_type == 0:
        # "skel": param 0 = center, params 1..4 on the cross (ring slots 1,3,5,7).
        k = k.at[:, :, 1, 1].set(weight[:, :, 0])
        for j, p in enumerate((1, 3, 5, 7)):
            dr, dc = _RING[(p + rot) % 8]
            k = k.at[:, :, dr, dc].set(weight[:, :, j + 1])
    else:
        # "bar": param 0 = center, params 1,2 on opposite ring slots (vertical bar).
        k = k.at[:, :, 1, 1].set(weight[:, :, 0])
        for j, p in enumerate((1, 5)):
            dr, dc = _RING[(p + rot) % 8]
            k = k.at[:, :, dr, dc].set(weight[:, :, j + 1])
    return k


# ---------------------------------------------------------------------------
# Pallas 3x3 conv kernel (stride=1, dilation=1), NHWC, lane-dense channels
# ---------------------------------------------------------------------------

def _gconv3x3_kernel(x_ref, w_ref, o_ref):
    # x_ref: (TH+2, Wp, C)   bf16 halo-inclusive input tile (C = Cin padded to 128k)
    # w_ref: (9*C, TCO)      bf16 rotated kernel, rows ordered (kh, kw, cin)
    # o_ref: (TH, W, TCO)    f32 output tile (TCO = 128 -> unmasked lane-dense store)
    TH, W, TCO = o_ref.shape
    C = x_ref.shape[-1]
    acc = jnp.zeros((TH * W, TCO), jnp.float32)
    for kh in range(3):
        # Fuse the 3 kw taps of this kernel row into one MXU contraction with
        # K = 3*C: concatenate the kw-shifted windows on the lane axis (each
        # piece is a multiple of 128 lanes, so the concat is copy-only).
        slab = jnp.concatenate(
            [x_ref[kh:kh + TH, kw:kw + W, :] for kw in range(3)], axis=-1)
        slab = slab.reshape(TH * W, 3 * C)      # cheap when W % 8 == 0
        w_kh = w_ref[kh * 3 * C:(kh + 1) * 3 * C, :]
        acc = acc + jnp.dot(slab, w_kh, preferred_element_type=jnp.float32)
    o_ref[...] = acc.reshape(TH, W, TCO).astype(o_ref.dtype)


def pallas_gconv3x3(x_tiles, w9c, h_out, w_out):
    """x_tiles: (N, nH, TH+2, Wp, Cp) bf16; w9c: (R, 9*Cp, COp) bf16.

    Returns (N, R, h_out, w_out, COp) float32.
    """
    N, nH, th_halo, Wp, Cp = x_tiles.shape
    R, K9, COp = w9c.shape
    TH = th_halo - 2
    TCO = LANE
    nCO = COp // TCO
    grid = (N, R, nH, nCO)

    return pl.pallas_call(
        _gconv3x3_kernel,
        out_shape=jax.ShapeDtypeStruct((N, R, h_out, w_out, COp), jnp.float32),
        grid=grid,
        in_specs=[
            # halo-inclusive H tile; block index depends only on (n, h) so the
            # pipeline skips re-DMA while r / co vary.
            pl.BlockSpec((None, None, th_halo, Wp, Cp),
                         lambda n, r, h, co: (n, h, 0, 0, 0)),
            # rotated weight slab for (rotation r, cout tile co); constant
            # across the inner h loop.
            pl.BlockSpec((None, K9, TCO), lambda n, r, h, co: (r, 0, co)),
        ],
        out_specs=pl.BlockSpec((None, None, TH, w_out, TCO),
                               lambda n, r, h, co: (n, r, h, 0, co)),
        compiler_params=pltpu.CompilerParams(
            dimension_semantics=("parallel", "parallel", "parallel", "parallel"),
            vmem_limit_bytes=32 * 1024 * 1024),
    )(x_tiles, w9c)


# ---------------------------------------------------------------------------
# GConv module (JAX port, is_first=True path)
# ---------------------------------------------------------------------------

class GConv:
    def __init__(self, in_channels, out_channels, kernel_type, is_first=True,
                 rot_1x1_in=False, stride=1, padding=1, dilation=1,
                 norm=None, activation=None, tile_h=None, key=None):
        if kernel_type == 0:
            self.num_kernel, self.kernel_rot = 5, 8
        elif kernel_type == 1:
            self.num_kernel, self.kernel_rot = 9, 4
        else:
            self.num_kernel, self.kernel_rot = 3, 8
        self.kernel_type = kernel_type
        self.in_channels = in_channels
        self.out_channels = out_channels
        self.is_first = is_first
        self.rot_1x1_in = rot_1x1_in
        self.stride = (stride, stride) if isinstance(stride, int) else tuple(stride)
        self.padding = (padding, padding) if isinstance(padding, int) else tuple(padding)
        self.dilation = (dilation, dilation) if isinstance(dilation, int) else tuple(dilation)
        self.norm = norm
        self.activation = activation
        self.tile_h = tile_h
        assert self.stride == (1, 1) and self.dilation == (1, 1), \
            "Pallas path implements stride=1, dilation=1 (module defaults)"
        if not is_first:
            # TODO(synk): the group-equivariant-input path (5-D input, per-rotation
            # cyclic shuffle of a (O, I, kernel_rot, num_kernel) weight) is not
            # ported; only the is_first (4-D input) weight layout is implemented.
            raise NotImplementedError("only the is_first=True path is ported")
        if key is None:
            key = jax.random.PRNGKey(0)
        # weight: (out_channels, in_channels, num_kernel), deterministic init.
        self.weight = jax.random.normal(
            key, (out_channels, in_channels, self.num_kernel), jnp.float32) * 0.1

    def forward(self, x_nchw):
        # x_nchw: (N, Cin, H, W) f32 -> (N, Cout, kernel_rot, H_out, W_out) f32
        N, Cin, H, W = x_nchw.shape
        assert Cin == self.in_channels
        ph, pw = self.padding
        h_out = H + 2 * ph - 2
        w_out = W + 2 * pw - 2
        assert h_out > 0 and w_out > 0
        R = self.kernel_rot
        step = 8 // R

        # ---- rotated effective kernels, padded + packed for the MXU ----------
        Cp = _round_up(Cin, LANE)                     # lane-dense input channels
        COp = _round_up(self.out_channels, LANE)      # lane-dense output channels
        k3 = jnp.stack([build_effective_3x3(self.weight, self.kernel_type, step * r)
                        for r in range(R)], axis=0)                  # (R, O, I, 3, 3)
        k3 = jnp.pad(k3, ((0, 0), (0, COp - self.out_channels),
                          (0, Cp - Cin), (0, 0), (0, 0)))            # (R, COp, Cp, 3, 3)
        # rows ordered (kh, kw, cin) to match the in-kernel im2col slab
        w9c = jnp.transpose(k3, (0, 3, 4, 2, 1)).reshape(R, 9 * Cp, COp)
        w9c = w9c.astype(jnp.bfloat16)

        # ---- activations: NHWC, bf16, spatial + channel zero padding ---------
        x = jnp.transpose(x_nchw, (0, 2, 3, 1)).astype(jnp.bfloat16)
        x = jnp.pad(x, ((0, 0), (ph, ph), (pw, pw), (0, Cp - Cin)))  # (N, Hp, Wp, Cp)

        # ---- overlapping H tiles (2-row halo materialized once in HBM) -------
        # Halo duplication keeps all BlockSpecs plain Blocked (no pl.Element),
        # bounds VMEM per grid step to the tile and keeps the pipeline deep.
        TH = self.tile_h or _largest_divisor_leq(h_out, max(8, 256 // max(w_out, 1)))
        assert h_out % TH == 0, (h_out, TH)
        nH = h_out // TH
        x_tiles = jnp.stack(
            [lax.slice_in_dim(x, h * TH, h * TH + TH + 2, axis=1) for h in range(nH)],
            axis=1)                                                  # (N, nH, TH+2, Wp, Cp)

        out = pallas_gconv3x3(x_tiles, w9c, h_out, w_out)   # (N, R, H, W, COp) f32
        out = out[..., :self.out_channels]                  # drop channel padding
        out = jnp.transpose(out, (0, 4, 1, 2, 3))           # (N, Cout, R, H, W)

        if self.norm is not None:
            out = jnp.stack([self.norm(out[:, :, r]) for r in range(R)], axis=2)
        if self.activation is not None:
            out = self.activation(out)
        return out

    __call__ = forward


# ---------------------------------------------------------------------------
# main
# ---------------------------------------------------------------------------

if __name__ == "__main__":
    key = jax.random.PRNGKey(0)
    kx, kw = jax.random.split(key)

    N, Cin, H, W = 2, 4, 16, 16
    Cout = 8
    kernel_type = 0          # "skel": 5 params, 8 rotations

    x = jax.random.normal(kx, (N, Cin, H, W), jnp.float32)

    conv = GConv(Cin, Cout, kernel_type, is_first=True, rot_1x1_in=False,
                 tile_h=8, key=kw)               # tile_h=8 -> 2 H-tiles, 32 grid steps
    out = jax.block_until_ready(conv(x))
    assert out.shape == (N, Cout, conv.kernel_rot, H, W), out.shape

    # Reference: per-rotation dense 3x3 conv (f32) with the same rotated kernels.
    step = 8 // conv.kernel_rot
    refs = []
    for r in range(conv.kernel_rot):
        k3 = build_effective_3x3(conv.weight, kernel_type, step * r)
        refs.append(lax.conv_general_dilated(
            x, k3, window_strides=(1, 1), padding=((1, 1), (1, 1)),
            dimension_numbers=("NCHW", "OIHW", "NCHW")))
    ref = jnp.stack(refs, axis=2)                # (N, Cout, R, H, W)

    err = float(jnp.max(jnp.abs(out - ref)))
    assert err < 3e-2, err                       # bf16 inputs vs f32 reference
    print("KERNEL_OK")
</pallas_src>

<mosaic_0001>
module attributes {stable_mosaic.version = 11 : i64} {
  func.func @_gconv3x3_kernel(%arg0: i32, %arg1: i32, %arg2: i32, %arg3: i32, %arg4: memref<1x1x10x18x128xbf16, #tpu.memory_space<vmem>>, %arg5: memref<1x1152x128xbf16, #tpu.memory_space<vmem>>, %arg6: memref<1x1x8x16x128xf32, #tpu.memory_space<vmem>>) attributes {dimension_semantics = [#tpu.dimension_semantics<parallel>, #tpu.dimension_semantics<parallel>, #tpu.dimension_semantics<parallel>, #tpu.dimension_semantics<parallel>], iteration_bounds = array<i64: 2, 8, 2, 1>, scalar_prefetch = 0 : i64, scratch_operands = 0 : i64, tpu.core_type = #tpu.core_type<tc>, window_params = [{transform_indices = @transform_0, window_bounds = array<i64: 1, 1, 10, 18, 128>}, {transform_indices = @transform_1, window_bounds = array<i64: 1, 1152, 128>}, {transform_indices = @transform_2, window_bounds = array<i64: 1, 1, 8, 16, 128>}]} {
    %cst = arith.constant 0.000000e+00 : f32
    %0 = vector.broadcast %cst : f32 to vector<128x128xf32>
    %c0 = arith.constant 0 : index
    %c0_0 = arith.constant 0 : index
    %c0_1 = arith.constant 0 : index
    %c0_2 = arith.constant 0 : index
    %c0_3 = arith.constant 0 : index
    %1 = vector.load %arg4[%c0, %c0_0, %c0_1, %c0_2, %c0_3] : memref<1x1x10x18x128xbf16, #tpu.memory_space<vmem>>, vector<1x1x8x16x128xbf16>
    %2 = vector.shape_cast %1 : vector<1x1x8x16x128xbf16> to vector<8x16x128xbf16>
    %c0_4 = arith.constant 0 : index
    %c0_5 = arith.constant 0 : index
    %c0_6 = arith.constant 0 : index
    %c1 = arith.constant 1 : index
    %c0_7 = arith.constant 0 : index
    %3 = vector.load %arg4[%c0_4, %c0_5, %c0_6, %c1, %c0_7] : memref<1x1x10x18x128xbf16, #tpu.memory_space<vmem>>, vector<1x1x8x16x128xbf16>
    %4 = vector.shape_cast %3 : vector<1x1x8x16x128xbf16> to vector<8x16x128xbf16>
    %c0_8 = arith.constant 0 : index
    %c0_9 = arith.constant 0 : index
    %c0_10 = arith.constant 0 : index
    %c2 = arith.constant 2 : index
    %c0_11 = arith.constant 0 : index
    %5 = vector.load %arg4[%c0_8, %c0_9, %c0_10, %c2, %c0_11] : memref<1x1x10x18x128xbf16, #tpu.memory_space<vmem>>, vector<1x1x8x16x128xbf16>
    %6 = vector.shape_cast %5 : vector<1x1x8x16x128xbf16> to vector<8x16x128xbf16>
    %7 = tpu.concatenate %2, %4, %6 in 2 : vector<8x16x128xbf16>, vector<8x16x128xbf16>, vector<8x16x128xbf16> -> vector<8x16x384xbf16>
    %8 = vector.shape_cast %7 : vector<8x16x384xbf16> to vector<128x384xbf16>
    %c0_12 = arith.constant 0 : index
    %c0_13 = arith.constant 0 : index
    %c0_14 = arith.constant 0 : index
    %9 = vector.load %arg5[%c0_12, %c0_13, %c0_14] : memref<1x1152x128xbf16, #tpu.memory_space<vmem>>, vector<1x384x128xbf16>
    %10 = vector.shape_cast %9 : vector<1x384x128xbf16> to vector<384x128xbf16>
    %cst_15 = arith.constant dense<0.000000e+00> : vector<128x128xf32>
    %11 = tpu.matmul %8, %10, %cst_15 {dimension_numbers = #tpu.dot_dimension_numbers<[1], [0], [0], [1], [0, 0, 1, 1], [], []>} : vector<128x384xbf16>, vector<384x128xbf16>, vector<128x128xf32> -> vector<128x128xf32>
    %12 = arith.addf %0, %11 : vector<128x128xf32>
    %c0_16 = arith.constant 0 : index
    %c0_17 = arith.constant 0 : index
    %c1_18 = arith.constant 1 : index
    %c0_19 = arith.constant 0 : index
    %c0_20 = arith.constant 0 : index
    %13 = vector.load %arg4[%c0_16, %c0_17, %c1_18, %c0_19, %c0_20] : memref<1x1x10x18x128xbf16, #tpu.memory_space<vmem>>, vector<1x1x8x16x128xbf16>
    %14 = vector.shape_cast %13 : vector<1x1x8x16x128xbf16> to vector<8x16x128xbf16>
    %c0_21 = arith.constant 0 : index
    %c0_22 = arith.constant 0 : index
    %c1_23 = arith.constant 1 : index
    %c1_24 = arith.constant 1 : index
    %c0_25 = arith.constant 0 : index
    %15 = vector.load %arg4[%c0_21, %c0_22, %c1_23, %c1_24, %c0_25] : memref<1x1x10x18x128xbf16, #tpu.memory_space<vmem>>, vector<1x1x8x16x128xbf16>
    %16 = vector.shape_cast %15 : vector<1x1x8x16x128xbf16> to vector<8x16x128xbf16>
    %c0_26 = arith.constant 0 : index
    %c0_27 = arith.constant 0 : index
    %c1_28 = arith.constant 1 : index
    %c2_29 = arith.constant 2 : index
    %c0_30 = arith.constant 0 : index
    %17 = vector.load %arg4[%c0_26, %c0_27, %c1_28, %c2_29, %c0_30] : memref<1x1x10x18x128xbf16, #tpu.memory_space<vmem>>, vector<1x1x8x16x128xbf16>
    %18 = vector.shape_cast %17 : vector<1x1x8x16x128xbf16> to vector<8x16x128xbf16>
    %19 = tpu.concatenate %14, %16, %18 in 2 : vector<8x16x128xbf16>, vector<8x16x128xbf16>, vector<8x16x128xbf16> -> vector<8x16x384xbf16>
    %20 = vector.shape_cast %19 : vector<8x16x384xbf16> to vector<128x384xbf16>
    %c0_31 = arith.constant 0 : index
    %c384 = arith.constant 384 : index
    %c0_32 = arith.constant 0 : index
    %21 = vector.load %arg5[%c0_31, %c384, %c0_32] : memref<1x1152x128xbf16, #tpu.memory_space<vmem>>, vector<1x384x128xbf16>
    %22 = vector.shape_cast %21 : vector<1x384x128xbf16> to vector<384x128xbf16>
    %cst_33 = arith.constant dense<0.000000e+00> : vector<128x128xf32>
    %23 = tpu.matmul %20, %22, %cst_33 {dimension_numbers = #tpu.dot_dimension_numbers<[1], [0], [0], [1], [0, 0, 1, 1], [], []>} : vector<128x384xbf16>, vector<384x128xbf16>, vector<128x128xf32> -> vector<128x128xf32>
    %24 = arith.addf %12, %23 : vector<128x128xf32>
    %c0_34 = arith.constant 0 : index
    %c0_35 = arith.constant 0 : index
    %c2_36 = arith.constant 2 : index
    %c0_37 = arith.constant 0 : index
    %c0_38 = arith.constant 0 : index
    %25 = vector.load %arg4[%c0_34, %c0_35, %c2_36, %c0_37, %c0_38] : memref<1x1x10x18x128xbf16, #tpu.memory_space<vmem>>, vector<1x1x8x16x128xbf16>
    %26 = vector.shape_cast %25 : vector<1x1x8x16x128xbf16> to vector<8x16x128xbf16>
    %c0_39 = arith.constant 0 : index
    %c0_40 = arith.constant 0 : index
    %c2_41 = arith.constant 2 : index
    %c1_42 = arith.constant 1 : index
    %c0_43 = arith.constant 0 : index
    %27 = vector.load %arg4[%c0_39, %c0_40, %c2_41, %c1_42, %c0_43] : memref<1x1x10x18x128xbf16, #tpu.memory_space<vmem>>, vector<1x1x8x16x128xbf16>
    %28 = vector.shape_cast %27 : vector<1x1x8x16x128xbf16> to vector<8x16x128xbf16>
    %c0_44 = arith.constant 0 : index
    %c0_45 = arith.constant 0 : index
    %c2_46 = arith.constant 2 : index
    %c2_47 = arith.constant 2 : index
    %c0_48 = arith.constant 0 : index
    %29 = vector.load %arg4[%c0_44, %c0_45, %c2_46, %c2_47, %c0_48] : memref<1x1x10x18x128xbf16, #tpu.memory_space<vmem>>, vector<1x1x8x16x128xbf16>
    %30 = vector.shape_cast %29 : vector<1x1x8x16x128xbf16> to vector<8x16x128xbf16>
    %31 = tpu.concatenate %26, %28, %30 in 2 : vector<8x16x128xbf16>, vector<8x16x128xbf16>, vector<8x16x128xbf16> -> vector<8x16x384xbf16>
    %32 = vector.shape_cast %31 : vector<8x16x384xbf16> to vector<128x384xbf16>
    %c0_49 = arith.constant 0 : index
    %c768 = arith.constant 768 : index
    %c0_50 = arith.constant 0 : index
    %33 = vector.load %arg5[%c0_49, %c768, %c0_50] : memref<1x1152x128xbf16, #tpu.memory_space<vmem>>, vector<1x384x128xbf16>
    %34 = vector.shape_cast %33 : vector<1x384x128xbf16> to vector<384x128xbf16>
    %cst_51 = arith.constant dense<0.000000e+00> : vector<128x128xf32>
    %35 = tpu.matmul %32, %34, %cst_51 {dimension_numbers = #tpu.dot_dimension_numbers<[1], [0], [0], [1], [0, 0, 1, 1], [], []>} : vector<128x384xbf16>, vector<384x128xbf16>, vector<128x128xf32> -> vector<128x128xf32>
    %36 = arith.addf %24, %35 : vector<128x128xf32>
    %37 = vector.shape_cast %36 : vector<128x128xf32> to vector<8x16x128xf32>
    %c0_52 = arith.constant 0 : index
    %c0_53 = arith.constant 0 : index
    %c0_54 = arith.constant 0 : index
    %c0_55 = arith.constant 0 : index
    %c0_56 = arith.constant 0 : index
    %38 = vector.load %arg6[%c0_52, %c0_53, %c0_54, %c0_55, %c0_56] : memref<1x1x8x16x128xf32, #tpu.memory_space<vmem>>, vector<1x1x8x16x128xf32>
    %39 = vector.shape_cast %38 : vector<1x1x8x16x128xf32> to vector<8x16x128xf32>
    %40 = vector.shape_cast %37 : vector<8x16x128xf32> to vector<1x1x8x16x128xf32>
    tpu.vector_store %arg6[%c0_52, %c0_53, %c0_54, %c0_55, %c0_56], %40 {strides = array<i32>} : memref<1x1x8x16x128xf32, #tpu.memory_space<vmem>>, vector<1x1x8x16x128xf32>,
    return
  }
  func.func @transform_0(%arg0: i32, %arg1: i32, %arg2: i32, %arg3: i32) -> (i32, i32, i32, i32, i32) {
    %c0_i32 = arith.constant 0 : i32
    %c0_i32_0 = arith.constant 0 : i32
    %c0_i32_1 = arith.constant 0 : i32
    %c0_i32_2 = arith.constant 0 : i32
    return %arg0, %arg2, %c0_i32, %c0_i32_0, %c0_i32_1 : i32, i32, i32, i32, i32
  }
  func.func @transform_1(%arg0: i32, %arg1: i32, %arg2: i32, %arg3: i32) -> (i32, i32, i32) {
    %c0_i32 = arith.constant 0 : i32
    %c0_i32_0 = arith.constant 0 : i32
    return %arg1, %c0_i32, %arg3 : i32, i32, i32
  }
  func.func @transform_2(%arg0: i32, %arg1: i32, %arg2: i32, %arg3: i32) -> (i32, i32, i32, i32, i32) {
    %c0_i32 = arith.constant 0 : i32
    %c0_i32_0 = arith.constant 0 : i32
    return %arg0, %arg1, %arg2, %c0_i32, %arg3 : i32, i32, i32, i32, i32
  }
}

</mosaic_0001>

<llo_original>
// kernel: tpu_custom_call.1
$region0: #{tpu_custom_call.1}
  #allocation0 [shape = 'u32[]', space=smem, size = 0x4, offset = 0x4, fixed_abs, tag = 'smem constant byte address 0x4 - core index']
  #allocation1 [shape = 'u32[144,128]{1,0:T(1,128)}', space=vmem, size = 0x12000, scoped, tag = 'internal scratch']
  %s0 = inlined_call_operand.vmem [shape: bf16[2,2,10,18,128], index: 0, kind: input, shape index: {}]
  %s1 = inlined_call_operand.hbm [shape: bf16[8,1152,128], index: 1, kind: input, shape index: {}]
  %s2 = inlined_call_operand.hbm [shape: f32[2,8,16,16,128], index: 2, kind: output, shape index: {}]
  %s3 = sld [smem:[#allocation0]]
  $region45: #{tpu_custom_call.1} parent=0
    _
  %s5 = ssub.s32 1, %s3
  %s6 = scalar_select 0, %s5, %s3
  $region1: #{tpu_custom_call.1} parent=0
    #allocation2 [shape = 'u8[589824]{0}', space=vmem, size = 0x90000, scoped, tag = 'input window, operand 1']
    #allocation3 [shape = 's32[2]{0}', space=sflag, size = 0x8, scoped, tag = 'scoped memory for tpu_custom_call.1']
    #allocation4 [shape = 's32[2]{0}', space=sflag, size = 0x8, scoped, tag = 'scoped memory for tpu_custom_call.1']
    #allocation5 [shape = 'u8[131072]{0}', space=vmem, size = 0x20000, scoped, tag = 'output window, operand 0']
    %7 = vsyncpa [#allocation3], 0
    %s8 = scalar_lea.sflag [#allocation3], 1
    %9 = vsyncpa %s8, 0
    %10 = vsyncpa [#allocation4], 0
    %s11 = scalar_lea.sflag [#allocation4], 1
    %12 = vsyncpa %s11, 0
    loop: start=0, step=1, limit=34
    $region2: #{tpu_custom_call.1} parent=1 // loop_pre_header
      _
    $region3: #{tpu_custom_call.1} parent=1 // loop_header
      %s14 = sphi 0, %s18
      %p15 = scmp.ge.s32.totalorder %s14, 34
      %s21 = sphi 0, %s47
      %s22 = sphi 0, %s43
      %s23 = sphi 0, %s39
      %s24 = sphi 0, %s35
      %s25 = sphi 0, %s21
      %s26 = sphi 0, %s22
      %s27 = sphi 0, %s23
      %s28 = sphi 0, %s24
      %s29 = sphi 0, %s25
      %s30 = sphi 0, %s26
      %s31 = sphi 0, %s27
      %s32 = sphi 0, %s28
      %s52 = sphi 0, %s54
      %s55 = sphi 0, %s52
      %s56 = sphi 0, %s55
      %s72 = sphi 0, %s56
      %s80 = sphi 0, %s82
      %s83 = sphi 0, %s80
      %s84 = sphi 0, %s83
      %s100 = sphi 0, %s84
      %s112 = sphi 0, %s114
      %s115 = sphi 0, %s112
      %s116 = sphi 0, %s115
      %s132 = sphi 0, %s116
    $region4: #{tpu_custom_call.1} parent=1 // loop_header_branch
      %17 = sbr.rel (%p15) target = $region8
    $region5: #{tpu_custom_call.1} parent=1 // loop_body
      %s19 = ssub.s32 %s14, 1
      %s20 = ssub.s32 %s14, 2
      %s33 = sadd.s32 1, %s24
      %p34 = scmp.ge.s32.totalorder %s33, 1
      %s35 = scalar_select %p34, 0, %s33
      %s36 = sadd.s32 1, %s23
      %s37 = scalar_select %p34, %s36, %s23
      %p38 = scmp.ge.s32.totalorder %s37, 2
      %s39 = scalar_select %p38, 0, %s37
      %s40 = sadd.s32 1, %s22
      %s41 = scalar_select %p38, %s40, %s22
      %p42 = scmp.ge.s32.totalorder %s41, 8
      %s43 = scalar_select %p42, 0, %s41
      %s44 = sadd.s32 1, %s21
      %s45 = scalar_select %p42, %s44, %s21
      %p46 = scmp.ge.s32.totalorder %s45, 2
      %s47 = scalar_select %p46, 0, %s45
      %s48 = ssub.s32 %s21, %s47
      %s49 = ssub.s32 %s23, %s39
      %s50 = sor.u32 %s48, %s49
      %p51 = scmp.eq.s32.totalorder %s50, 0
      %s53 = sadd.s32 %s52, 1
      %s54 = scalar_select %p51, %s52, %s53
      %p57 = pneg %p51
      %p58 = scmp.eq.s32.totalorder %s14, 31
      %p59 = por %p57, %p58
      %p60 = scmp.ne.s32.totalorder %s52, %s55
      %p61 = scmp.eq.s32.totalorder %s14, 0
      %p62 = por %p60, %p61
      %p63 = scmp.ne.s32.totalorder %s52, %s55
      %p64 = scmp.eq.s32.totalorder %s19, 31
      %p65 = por %p63, %p64
      %p66 = scmp.ne.s32.totalorder %s55, %s56
      %p67 = scmp.eq.s32.totalorder %s19, 0
      %p68 = por %p66, %p67
      %p69 = scmp.ne.s32.totalorder %s55, %s56
      %p70 = scmp.eq.s32.totalorder %s20, 31
      %p71 = por %p69, %p70
      %p73 = scmp.ne.s32.totalorder %s56, %s72
      %p74 = scmp.eq.s32.totalorder %s20, 0
      %p75 = por %p73, %p74
      %s76 = ssub.s32 %s22, %s43
      %s77 = ssub.s32 %s24, %s35
      %s78 = sor.u32 %s76, %s77
      %p79 = scmp.eq.s32.totalorder %s78, 0
      %s81 = sadd.s32 %s80, 1
      %s82 = scalar_select %p79, %s80, %s81
      %p85 = pneg %p79
      %p86 = scmp.eq.s32.totalorder %s14, 31
      %p87 = por %p85, %p86
      %p88 = scmp.ne.s32.totalorder %s80, %s83
      %p89 = scmp.eq.s32.totalorder %s14, 0
      %p90 = por %p88, %p89
      %p91 = scmp.ne.s32.totalorder %s80, %s83
      %p92 = scmp.eq.s32.totalorder %s19, 31
      %p93 = por %p91, %p92
      %p94 = scmp.ne.s32.totalorder %s83, %s84
      %p95 = scmp.eq.s32.totalorder %s19, 0
      %p96 = por %p94, %p95
      %p97 = scmp.ne.s32.totalorder %s83, %s84
      %p98 = scmp.eq.s32.totalorder %s20, 31
      %p99 = por %p97, %p98
      %p101 = scmp.ne.s32.totalorder %s84, %s100
      %p102 = scmp.eq.s32.totalorder %s20, 0
      %p103 = por %p101, %p102
      %s104 = ssub.s32 %s21, %s47
      %s105 = ssub.s32 %s22, %s43
      %s106 = sor.u32 %s104, %s105
      %s107 = ssub.s32 %s23, %s39
      %s108 = sor.u32 %s106, %s107
      %s109 = ssub.s32 %s24, %s35
      %s110 = sor.u32 %s108, %s109
      %p111 = scmp.eq.s32.totalorder %s110, 0
      %s113 = sadd.s32 %s112, 1
      %s114 = scalar_select %p111, %s112, %s113
      %p117 = pneg %p111
      %p118 = scmp.eq.s32.totalorder %s14, 31
      %p119 = por %p117, %p118
      %p120 = scmp.ne.s32.totalorder %s112, %s115
      %p121 = scmp.eq.s32.totalorder %s14, 0
      %p122 = por %p120, %p121
      %p123 = scmp.ne.s32.totalorder %s112, %s115
      %p124 = scmp.eq.s32.totalorder %s19, 31
      %p125 = por %p123, %p124
      %p126 = scmp.ne.s32.totalorder %s115, %s116
      %p127 = scmp.eq.s32.totalorder %s19, 0
      %p128 = por %p126, %p127
      %p129 = scmp.ne.s32.totalorder %s115, %s116
      %p130 = scmp.eq.s32.totalorder %s20, 31
      %p131 = por %p129, %p130
      %p133 = scmp.ne.s32.totalorder %s116, %s132
      %p134 = scmp.eq.s32.totalorder %s20, 0
      %p135 = por %p133, %p134
      %p136 = scmp.le.s32.totalorder 1, %s14
      %p137 = scmp.lt.s32.totalorder %s14, 33
      %p138 = pnand %p136, %p137
      %p139 = pneg %p138
      // Predicated region
      $region9: #{tpu_custom_call.1} parent=5 // pred_check
        _
      $region10: #{tpu_custom_call.1} parent=5 // pred_check_branch
        %141 = sbr.rel (%p138) target = $region12
      $region11: #{tpu_custom_call.1} parent=5 // pred_region
        %s142 = ssub.s32 %s14, 1
      $region12: #{tpu_custom_call.1} parent=5 // pred_fallthru
        _
      %p143 = scmp.lt.s32.totalorder %s14, 32
      // Predicated region
      $region13: #{tpu_custom_call.1} parent=5 // pred_check
        %p144 = pneg %p143
      $region14: #{tpu_custom_call.1} parent=5 // pred_check_branch
        %146 = sbr.rel (%p144) target = $region16
      $region15: #{tpu_custom_call.1} parent=5 // pred_region
        // Predicated region
        $region17: #{tpu_custom_call.1} parent=15 // pred_check
          %p147 = pneg %p62
        $region18: #{tpu_custom_call.1} parent=15 // pred_check_branch
          %149 = sbr.rel (%p147) target = $region20
        $region19: #{tpu_custom_call.1} parent=15 // pred_region
          %p150 = scmp.lt.s32.totalorder %s21, 1
          %s151 = scalar_select %p150, %s21, 1
          %p152 = scmp.lt.s32.totalorder %s23, 1
          %s153 = scalar_select %p152, %s23, 1
          %s154 = smul.addr %s153, 30
          %s155 = smul.addr %s151, 60
          %s156 = sadd.s32 %s154, %s155
          %s157 = smul.addr %s156, 4
          %s158 = scalar_lea.vmem %s0, %s157
        $region20: #{tpu_custom_call.1} parent=15 // pred_fallthru
          _
        // Predicated region
        $region21: #{tpu_custom_call.1} parent=15 // pred_check
          %p159 = pneg %p90
        $region22: #{tpu_custom_call.1} parent=15 // pred_check_branch
          %161 = sbr.rel (%p159) target = $region24
        $region23: #{tpu_custom_call.1} parent=15 // pred_region
          %s162 = sand.u32 %s80, 1
          %s163 = scalar_lea.sflag [#allocation3], %s162
          %s164 = sand.u32 %s80, 1
          %s165 = smul.addr %s164, 576
          %s166 = scalar_lea.vmem [#allocation2], %s165
          %s168 = ssub.s32 9216, 9216
          %169 = vsyncadd %s163, %s168
          %s170 = smul.addr %s22, 144
          %s171 = sadd.s32 %s24, %s170
          %s172 = smul.addr %s171, 64
          %s173 = scalar_lea.hbm %s1, %s172
          %s174 = sshll.u32 %s166, 4
          %s175 = int_to_ptr.vmem [resolvable:$true] %s174
          %180 = dma.hbm_to_vmem [thread:$0]  %s173, 9216, %s175, %s163, 64, 64, 4
        $region24: #{tpu_custom_call.1} parent=15 // pred_fallthru
          _
      $region16: #{tpu_custom_call.1} parent=5 // pred_fallthru
        _
      %p181 = scmp.le.s32.totalorder 1, %s14
      %p182 = scmp.lt.s32.totalorder %s14, 33
      %p183 = pnand %p181, %p182
      %p184 = pneg %p183
      // Predicated region
      $region25: #{tpu_custom_call.1} parent=5 // pred_check
        _
      $region26: #{tpu_custom_call.1} parent=5 // pred_check_branch
        %186 = sbr.rel (%p183) target = $region28
      $region27: #{tpu_custom_call.1} parent=5 // pred_region
        %s187 = ssub.s32 %s14, 1
        %s188 = sand.u32 %s83, 1
        %s189 = scalar_lea.sflag [#allocation3], %s188
        %s190 = sand.u32 %s83, 1
        %s191 = smul.addr %s190, 576
        %s192 = scalar_lea.vmem [#allocation2], %s191
        // Predicated region
        $region29: #{tpu_custom_call.1} parent=27 // pred_check
          %p193 = pneg %p96
        $region30: #{tpu_custom_call.1} parent=27 // pred_check_branch
          %195 = sbr.rel (%p193) target = $region32
        $region31: #{tpu_custom_call.1} parent=27 // pred_region
          %196 = dma.done %s189, 9216
        $region32: #{tpu_custom_call.1} parent=27 // pred_fallthru
          _
        %p197 = scmp.lt.s32.totalorder %s25, 1
        %s198 = scalar_select %p197, %s25, 1
        %p199 = scmp.lt.s32.totalorder %s27, 1
        %s200 = scalar_select %p199, %s27, 1
        %s201 = smul.addr %s200, 30
        %s202 = smul.addr %s198, 60
        %s203 = sadd.s32 %s201, %s202
        %s204 = smul.addr %s203, 4
        %s205 = scalar_lea.vmem %s0, %s204
        %p206 = pneg %p68
        %p207 = pneg %p65
        %s208 = sand.u32 %s83, 1
        %s209 = scalar_lea.sflag [#allocation3], %s208
        %s210 = sand.u32 %s83, 1
        %s211 = smul.addr %s210, 576
        %s212 = scalar_lea.vmem [#allocation2], %s211
        %p213 = pneg %p96
        %p214 = pneg %p93
        %p215 = pneg %p128
        %p216 = pneg %p125
        %s217 = sand.u32 %s115, 1
        %s218 = scalar_lea.sflag [#allocation4], %s217
        %s219 = sand.u32 %s115, 1
        %s220 = smul.addr %s219, 128
        %s221 = scalar_lea.vmem [#allocation5], %s220
        %p222 = scmp.lt.s32.totalorder %s25, 1
        %s223 = scalar_select %p222, %s25, 1
        %p224 = scmp.lt.s32.totalorder %s27, 1
        %s225 = scalar_select %p224, %s27, 1
        %s226 = smul.addr %s225, 30
        %s227 = smul.addr %s223, 60
        %s228 = sadd.s32 %s226, %s227
        %s229 = smul.addr %s228, 4
        %s230 = scalar_lea.vmem %s0, %s229
        %s231 = smul.u32 8, %s27
        %v233 = vld [vmem:[%s230] sm:$0xf]
        %v234 = vld [vmem:[%s230 + $0x4] sm:$0xf]
        %v235 = vld [vmem:[%s230 + $0xc] sm:$0xf]
        %v236 = vld [vmem:[%s230 + $0x10] sm:$0xf]
        %v237 = vld [vmem:[%s230 + $0x18] sm:$0xf]
        %v238 = vld [vmem:[%s230 + $0x1c] sm:$0xf]
        %v239 = vld [vmem:[%s230 + $0x24] sm:$0xf]
        %v240 = vld [vmem:[%s230 + $0x28] sm:$0xf]
        %v241 = vld [vmem:[%s230 + $0x30] sm:$0xf]
        %v242 = vld [vmem:[%s230 + $0x34] sm:$0xf]
        %v243 = vld [vmem:[%s230 + $0x3c] sm:$0xf]
        %v244 = vld [vmem:[%s230 + $0x40] sm:$0xf]
        %v245 = vld [vmem:[%s230 + $0x48] sm:$0xf]
        %v246 = vld [vmem:[%s230 + $0x4c] sm:$0xf]
        %v247 = vld [vmem:[%s230 + $0x54] sm:$0xf]
        %v248 = vld [vmem:[%s230 + $0x58] sm:$0xf]
        %v249 = vld [vmem:[%s230 + $0x8] sm:$0x1]
        %v250 = vld [vmem:[%s230 + $0x14] sm:$0x1]
        %v251 = vld [vmem:[%s230 + $0x20] sm:$0x1]
        %v252 = vld [vmem:[%s230 + $0x2c] sm:$0x1]
        %v253 = vld [vmem:[%s230 + $0x38] sm:$0x1]
        %v254 = vld [vmem:[%s230 + $0x44] sm:$0x1]
        %v255 = vld [vmem:[%s230 + $0x50] sm:$0x1]
        %v256 = vld [vmem:[%s230 + $0x5c] sm:$0x1]
        %v257 = vld [vmem:[%s230] sm:$0xe]
        %v258 = vld [vmem:[%s230 + $0xc] sm:$0xe]
        %v259 = vld [vmem:[%s230 + $0x18] sm:$0xe]
        %v260 = vld [vmem:[%s230 + $0x24] sm:$0xe]
        %v261 = vld [vmem:[%s230 + $0x30] sm:$0xe]
        %v262 = vld [vmem:[%s230 + $0x3c] sm:$0xe]
        %v263 = vld [vmem:[%s230 + $0x48] sm:$0xe]
        %v264 = vld [vmem:[%s230 + $0x54] sm:$0xe]
        %v281 = vunpack.c.l.b16 %v233
        %v282 = vunpack.c.l.b16 %v234
        %v283 = vunpack.c.l.b16 %v235
        %v284 = vunpack.c.l.b16 %v236
        %v285 = vunpack.c.l.b16 %v237
        %v286 = vunpack.c.l.b16 %v238
        %v287 = vunpack.c.l.b16 %v239
        %v288 = vunpack.c.l.b16 %v240
        %v289 = vunpack.c.l.b16 %v241
        %v290 = vunpack.c.l.b16 %v242
        %v291 = vunpack.c.l.b16 %v243
        %v292 = vunpack.c.l.b16 %v244
        %v293 = vunpack.c.l.b16 %v245
        %v294 = vunpack.c.l.b16 %v246
        %v295 = vunpack.c.l.b16 %v247
        %v296 = vunpack.c.l.b16 %v248
        %v297 = vpack.c.b16 %v282, %v281
        %v298 = vpack.c.b16 %v284, %v283
        %v299 = vpack.c.b16 %v286, %v285
        %v300 = vpack.c.b16 %v288, %v287
        %v301 = vpack.c.b16 %v290, %v289
        %v302 = vpack.c.b16 %v292, %v291
        %v303 = vpack.c.b16 %v294, %v293
        %v304 = vpack.c.b16 %v296, %v295
        %v321 = vunpack.c.l.b16 %v249
        %v322 = vunpack.c.l.b16 %v250
        %v323 = vunpack.c.l.b16 %v251
        %v324 = vunpack.c.l.b16 %v252
        %v325 = vunpack.c.l.b16 %v253
        %v326 = vunpack.c.l.b16 %v254
        %v327 = vunpack.c.l.b16 %v255
        %v328 = vunpack.c.l.b16 %v256
        %v329 = vpack.c.b16 %v321, %v321
        %v330 = vpack.c.b16 %v322, %v322
        %v331 = vpack.c.b16 %v323, %v323
        %v332 = vpack.c.b16 %v324, %v324
        %v333 = vpack.c.b16 %v325, %v325
        %v334 = vpack.c.b16 %v326, %v326
        %v335 = vpack.c.b16 %v327, %v327
        %v336 = vpack.c.b16 %v328, %v328
        %vm337 = vsmask.f32 7424
        %v339 = vshrl.u32 %v297, 16
        %v341 = vshll.u32 %v297, 16
        %v343 = vrot.slane %v341, 1
        %v344 = vor.u32 %v339, %v343
        %v346 = vshll.u32 %v329, 16
        %v348 = vrot.slane %v346, 1
        %v349 = vsel %vm337, %v344, %v348
        %v351 = vshrl.u32 %v298, 16
        %v353 = vshll.u32 %v298, 16
        %v355 = vrot.slane %v353, 1
        %v356 = vor.u32 %v351, %v355
        %v358 = vshll.u32 %v330, 16
        %v360 = vrot.slane %v358, 1
        %v361 = vsel %vm337, %v356, %v360
        %v363 = vshrl.u32 %v299, 16
        %v365 = vshll.u32 %v299, 16
        %v367 = vrot.slane %v365, 1
        %v368 = vor.u32 %v363, %v367
        %v370 = vshll.u32 %v331, 16
        %v372 = vrot.slane %v370, 1
        %v373 = vsel %vm337, %v368, %v372
        %v375 = vshrl.u32 %v300, 16
        %v377 = vshll.u32 %v300, 16
        %v379 = vrot.slane %v377, 1
        %v380 = vor.u32 %v375, %v379
        %v382 = vshll.u32 %v332, 16
        %v384 = vrot.slane %v382, 1
        %v385 = vsel %vm337, %v380, %v384
        %v387 = vshrl.u32 %v301, 16
        %v389 = vshll.u32 %v301, 16
        %v391 = vrot.slane %v389, 1
        %v392 = vor.u32 %v387, %v391
        %v394 = vshll.u32 %v333, 16
        %v396 = vrot.slane %v394, 1
        %v397 = vsel %vm337, %v392, %v396
        %v399 = vshrl.u32 %v302, 16
        %v401 = vshll.u32 %v302, 16
        %v403 = vrot.slane %v401, 1
        %v404 = vor.u32 %v399, %v403
        %v406 = vshll.u32 %v334, 16
        %v408 = vrot.slane %v406, 1
        %v409 = vsel %vm337, %v404, %v408
        %v411 = vshrl.u32 %v303, 16
        %v413 = vshll.u32 %v303, 16
        %v415 = vrot.slane %v413, 1
        %v416 = vor.u32 %v411, %v415
        %v418 = vshll.u32 %v335, 16
        %v420 = vrot.slane %v418, 1
        %v421 = vsel %vm337, %v416, %v420
        %v423 = vshrl.u32 %v304, 16
        %v425 = vshll.u32 %v304, 16
        %v427 = vrot.slane %v425, 1
        %v428 = vor.u32 %v423, %v427
        %v430 = vshll.u32 %v336, 16
        %v432 = vrot.slane %v430, 1
        %v433 = vsel %vm337, %v428, %v432
        %v450 = vunpack.c.l.b16 %v257
        %v451 = vunpack.c.l.b16 %v258
        %v452 = vunpack.c.l.b16 %v259
        %v453 = vunpack.c.l.b16 %v260
        %v454 = vunpack.c.l.b16 %v261
        %v455 = vunpack.c.l.b16 %v262
        %v456 = vunpack.c.l.b16 %v263
        %v457 = vunpack.c.l.b16 %v264
        %v458 = vpack.c.b16 %v282, %v450
        %v459 = vpack.c.b16 %v284, %v451
        %v460 = vpack.c.b16 %v286, %v452
        %v461 = vpack.c.b16 %v288, %v453
        %v462 = vpack.c.b16 %v290, %v454
        %v463 = vpack.c.b16 %v292, %v455
        %v464 = vpack.c.b16 %v294, %v456
        %v465 = vpack.c.b16 %v296, %v457
        %vm466 = vcmask 1046528
        %v467 = vrot.slane %v458, 1
        %v468 = vrot.slane %v329, 1
        %v469 = vsel %vm466, %v467, %v468
        %v470 = vrot.slane %v459, 1
        %v471 = vrot.slane %v330, 1
        %v472 = vsel %vm466, %v470, %v471
        %v473 = vrot.slane %v460, 1
        %v474 = vrot.slane %v331, 1
        %v475 = vsel %vm466, %v473, %v474
        %v476 = vrot.slane %v461, 1
        %v477 = vrot.slane %v332, 1
        %v478 = vsel %vm466, %v476, %v477
        %v479 = vrot.slane %v462, 1
        %v480 = vrot.slane %v333, 1
        %v481 = vsel %vm466, %v479, %v480
        %v482 = vrot.slane %v463, 1
        %v483 = vrot.slane %v334, 1
        %v484 = vsel %vm466, %v482, %v483
        %v485 = vrot.slane %v464, 1
        %v486 = vrot.slane %v335, 1
        %v487 = vsel %vm466, %v485, %v486
        %v488 = vrot.slane %v465, 1
        %v489 = vrot.slane %v336, 1
        %v490 = vsel %vm466, %v488, %v489
        %v499 = vld [vmem:[%s192] sm:$0xf]
        %v500 = vld [vmem:[%s192 + $0x4] sm:$0xf]
        %v501 = vld [vmem:[%s192 + $0x8] sm:$0xf]
        %v502 = vld [vmem:[%s192 + $0xc] sm:$0xf]
        %v503 = vld [vmem:[%s192 + $0x10] sm:$0xf]
        %v504 = vld [vmem:[%s192 + $0x14] sm:$0xf]
        %v505 = vld [vmem:[%s192 + $0x18] sm:$0xf]
        %v506 = vld [vmem:[%s192 + $0x1c] sm:$0xf]
        %v507 = vld [vmem:[%s192 + $0x20] sm:$0xf]
        %v508 = vld [vmem:[%s192 + $0x24] sm:$0xf]
        %v509 = vld [vmem:[%s192 + $0x28] sm:$0xf]
        %v510 = vld [vmem:[%s192 + $0x2c] sm:$0xf]
        %v511 = vld [vmem:[%s192 + $0x30] sm:$0xf]
        %v512 = vld [vmem:[%s192 + $0x34] sm:$0xf]
        %v513 = vld [vmem:[%s192 + $0x38] sm:$0xf]
        %v514 = vld [vmem:[%s192 + $0x3c] sm:$0xf]
        %v515 = vld [vmem:[%s192 + $0x40] sm:$0xf]
        %v516 = vld [vmem:[%s192 + $0x44] sm:$0xf]
        %v517 = vld [vmem:[%s192 + $0x48] sm:$0xf]
        %v518 = vld [vmem:[%s192 + $0x4c] sm:$0xf]
        %v519 = vld [vmem:[%s192 + $0x50] sm:$0xf]
        %v520 = vld [vmem:[%s192 + $0x54] sm:$0xf]
        %v521 = vld [vmem:[%s192 + $0x58] sm:$0xf]
        %v522 = vld [vmem:[%s192 + $0x5c] sm:$0xf]
        %v523 = vld [vmem:[%s192 + $0x60] sm:$0xf]
        %v524 = vld [vmem:[%s192 + $0x64] sm:$0xf]
        %v525 = vld [vmem:[%s192 + $0x68] sm:$0xf]
        %v526 = vld [vmem:[%s192 + $0x6c] sm:$0xf]
        %v527 = vld [vmem:[%s192 + $0x70] sm:$0xf]
        %v528 = vld [vmem:[%s192 + $0x74] sm:$0xf]
        %v529 = vld [vmem:[%s192 + $0x78] sm:$0xf]
        %v530 = vld [vmem:[%s192 + $0x7c] sm:$0xf]
        %v531 = vld [vmem:[%s192 + $0x80] sm:$0xf]
        %v532 = vld [vmem:[%s192 + $0x84] sm:$0xf]
        %v533 = vld [vmem:[%s192 + $0x88] sm:$0xf]
        %v534 = vld [vmem:[%s192 + $0x8c] sm:$0xf]
        %v535 = vld [vmem:[%s192 + $0x90] sm:$0xf]
        %v536 = vld [vmem:[%s192 + $0x94] sm:$0xf]
        %v537 = vld [vmem:[%s192 + $0x98] sm:$0xf]
        %v538 = vld [vmem:[%s192 + $0x9c] sm:$0xf]
        %v539 = vld [vmem:[%s192 + $0xa0] sm:$0xf]
        %v540 = vld [vmem:[%s192 + $0xa4] sm:$0xf]
        %v541 = vld [vmem:[%s192 + $0xa8] sm:$0xf]
        %v542 = vld [vmem:[%s192 + $0xac] sm:$0xf]
        %v543 = vld [vmem:[%s192 + $0xb0] sm:$0xf]
        %v544 = vld [vmem:[%s192 + $0xb4] sm:$0xf]
        %v545 = vld [vmem:[%s192 + $0xb8] sm:$0xf]
        %v546 = vld [vmem:[%s192 + $0xbc] sm:$0xf]
        %s547 = scalar_lea.vmem %s230, 12
        %v548 = vld [vmem:[%s547] sm:$0xf]
        %v549 = vld [vmem:[%s547 + $0x4] sm:$0xf]
        %v550 = vld [vmem:[%s547 + $0xc] sm:$0xf]
        %v551 = vld [vmem:[%s547 + $0x10] sm:$0xf]
        %v552 = vld [vmem:[%s547 + $0x18] sm:$0xf]
        %v553 = vld [vmem:[%s547 + $0x1c] sm:$0xf]
        %v554 = vld [vmem:[%s547 + $0x24] sm:$0xf]
        %v555 = vld [vmem:[%s547 + $0x28] sm:$0xf]
        %v556 = vld [vmem:[%s547 + $0x30] sm:$0xf]
        %v557 = vld [vmem:[%s547 + $0x34] sm:$0xf]
        %v558 = vld [vmem:[%s547 + $0x3c] sm:$0xf]
        %v559 = vld [vmem:[%s547 + $0x40] sm:$0xf]
        %v560 = vld [vmem:[%s547 + $0x48] sm:$0xf]
        %v561 = vld [vmem:[%s547 + $0x4c] sm:$0xf]
        %v562 = vld [vmem:[%s547 + $0x54] sm:$0xf]
        %v563 = vld [vmem:[%s547 + $0x58] sm:$0xf]
        %v564 = vld [vmem:[%s547 + $0x8] sm:$0x1]
        %v565 = vld [vmem:[%s547 + $0x14] sm:$0x1]
        %v566 = vld [vmem:[%s547 + $0x20] sm:$0x1]
        %v567 = vld [vmem:[%s547 + $0x2c] sm:$0x1]
        %v568 = vld [vmem:[%s547 + $0x38] sm:$0x1]
        %v569 = vld [vmem:[%s547 + $0x44] sm:$0x1]
        %v570 = vld [vmem:[%s547 + $0x50] sm:$0x1]
        %v571 = vld [vmem:[%s547 + $0x5c] sm:$0x1]
        %v572 = vld [vmem:[%s547] sm:$0xe]
        %v573 = vld [vmem:[%s547 + $0xc] sm:$0xe]
        %v574 = vld [vmem:[%s547 + $0x18] sm:$0xe]
        %v575 = vld [vmem:[%s547 + $0x24] sm:$0xe]
        %v576 = vld [vmem:[%s547 + $0x30] sm:$0xe]
        %v577 = vld [vmem:[%s547 + $0x3c] sm:$0xe]
        %v578 = vld [vmem:[%s547 + $0x48] sm:$0xe]
        %v579 = vld [vmem:[%s547 + $0x54] sm:$0xe]
        %v596 = vunpack.c.l.b16 %v548
        %v597 = vunpack.c.l.b16 %v549
        %v598 = vunpack.c.l.b16 %v550
        %v599 = vunpack.c.l.b16 %v551
        %v600 = vunpack.c.l.b16 %v552
        %v601 = vunpack.c.l.b16 %v553
        %v602 = vunpack.c.l.b16 %v554
        %v603 = vunpack.c.l.b16 %v555
        %v604 = vunpack.c.l.b16 %v556
        %v605 = vunpack.c.l.b16 %v557
        %v606 = vunpack.c.l.b16 %v558
        %v607 = vunpack.c.l.b16 %v559
        %v608 = vunpack.c.l.b16 %v560
        %v609 = vunpack.c.l.b16 %v561
        %v610 = vunpack.c.l.b16 %v562
        %v611 = vunpack.c.l.b16 %v563
        %v612 = vpack.c.b16 %v597, %v596
        %v613 = vpack.c.b16 %v599, %v598
        %v614 = vpack.c.b16 %v601, %v600
        %v615 = vpack.c.b16 %v603, %v602
        %v616 = vpack.c.b16 %v605, %v604
        %v617 = vpack.c.b16 %v607, %v606
        %v618 = vpack.c.b16 %v609, %v608
        %v619 = vpack.c.b16 %v611, %v610
        %v636 = vunpack.c.l.b16 %v564
        %v637 = vunpack.c.l.b16 %v565
        %v638 = vunpack.c.l.b16 %v566
        %v639 = vunpack.c.l.b16 %v567
        %v640 = vunpack.c.l.b16 %v568
        %v641 = vunpack.c.l.b16 %v569
        %v642 = vunpack.c.l.b16 %v570
        %v643 = vunpack.c.l.b16 %v571
        %v644 = vpack.c.b16 %v636, %v636
        %v645 = vpack.c.b16 %v637, %v637
        %v646 = vpack.c.b16 %v638, %v638
        %v647 = vpack.c.b16 %v639, %v639
        %v648 = vpack.c.b16 %v640, %v640
        %v649 = vpack.c.b16 %v641, %v641
        %v650 = vpack.c.b16 %v642, %v642
        %v651 = vpack.c.b16 %v643, %v643
        %v653 = vshrl.u32 %v612, 16
        %v655 = vshll.u32 %v612, 16
        %v657 = vrot.slane %v655, 1
        %v658 = vor.u32 %v653, %v657
        %v660 = vshll.u32 %v644, 16
        %v662 = vrot.slane %v660, 1
        %v663 = vsel %vm337, %v658, %v662
        %v665 = vshrl.u32 %v613, 16
        %v667 = vshll.u32 %v613, 16
        %v669 = vrot.slane %v667, 1
        %v670 = vor.u32 %v665, %v669
        %v672 = vshll.u32 %v645, 16
        %v674 = vrot.slane %v672, 1
        %v675 = vsel %vm337, %v670, %v674
        %v677 = vshrl.u32 %v614, 16
        %v679 = vshll.u32 %v614, 16
        %v681 = vrot.slane %v679, 1
        %v682 = vor.u32 %v677, %v681
        %v684 = vshll.u32 %v646, 16
        %v686 = vrot.slane %v684, 1
        %v687 = vsel %vm337, %v682, %v686
        %v689 = vshrl.u32 %v615, 16
        %v691 = vshll.u32 %v615, 16
        %v693 = vrot.slane %v691, 1
        %v694 = vor.u32 %v689, %v693
        %v696 = vshll.u32 %v647, 16
        %v698 = vrot.slane %v696, 1
        %v699 = vsel %vm337, %v694, %v698
        %v701 = vshrl.u32 %v616, 16
        %v703 = vshll.u32 %v616, 16
        %v705 = vrot.slane %v703, 1
        %v706 = vor.u32 %v701, %v705
        %v708 = vshll.u32 %v648, 16
        %v710 = vrot.slane %v708, 1
        %v711 = vsel %vm337, %v706, %v710
        %v713 = vshrl.u32 %v617, 16
        %v715 = vshll.u32 %v617, 16
        %v717 = vrot.slane %v715, 1
        %v718 = vor.u32 %v713, %v717
        %v720 = vshll.u32 %v649, 16
        %v722 = vrot.slane %v720, 1
        %v723 = vsel %vm337, %v718, %v722
        %v725 = vshrl.u32 %v618, 16
        %v727 = vshll.u32 %v618, 16
        %v729 = vrot.slane %v727, 1
        %v730 = vor.u32 %v725, %v729
        %v732 = vshll.u32 %v650, 16
        %v734 = vrot.slane %v732, 1
        %v735 = vsel %vm337, %v730, %v734
        %v737 = vshrl.u32 %v619, 16
        %v739 = vshll.u32 %v619, 16
        %v741 = vrot.slane %v739, 1
        %v742 = vor.u32 %v737, %v741
        %v744 = vshll.u32 %v651, 16
        %v746 = vrot.slane %v744, 1
        %v747 = vsel %vm337, %v742, %v746
        %v764 = vunpack.c.l.b16 %v572
        %v765 = vunpack.c.l.b16 %v573
        %v766 = vunpack.c.l.b16 %v574
        %v767 = vunpack.c.l.b16 %v575
        %v768 = vunpack.c.l.b16 %v576
        %v769 = vunpack.c.l.b16 %v577
        %v770 = vunpack.c.l.b16 %v578
        %v771 = vunpack.c.l.b16 %v579
        %v772 = vpack.c.b16 %v597, %v764
        %v773 = vpack.c.b16 %v599, %v765
        %v774 = vpack.c.b16 %v601, %v766
        %v775 = vpack.c.b16 %v603, %v767
        %v776 = vpack.c.b16 %v605, %v768
        %v777 = vpack.c.b16 %v607, %v769
        %v778 = vpack.c.b16 %v609, %v770
        %v779 = vpack.c.b16 %v611, %v771
        %v780 = vrot.slane %v772, 1
        %v781 = vrot.slane %v644, 1
        %v782 = vsel %vm466, %v780, %v781
        %v783 = vrot.slane %v773, 1
        %v784 = vrot.slane %v645, 1
        %v785 = vsel %vm466, %v783, %v784
        %v786 = vrot.slane %v774, 1
        %v787 = vrot.slane %v646, 1
        %v788 = vsel %vm466, %v786, %v787
        %v789 = vrot.slane %v775, 1
        %v790 = vrot.slane %v647, 1
        %v791 = vsel %vm466, %v789, %v790
        %v792 = vrot.slane %v776, 1
        %v793 = vrot.slane %v648, 1
        %v794 = vsel %vm466, %v792, %v793
        %v795 = vrot.slane %v777, 1
        %v796 = vrot.slane %v649, 1
        %v797 = vsel %vm466, %v795, %v796
        %v798 = vrot.slane %v778, 1
        %v799 = vrot.slane %v650, 1
        %v800 = vsel %vm466, %v798, %v799
        %v801 = vrot.slane %v779, 1
        %v802 = vrot.slane %v651, 1
        %v803 = vsel %vm466, %v801, %v802
        %v812 = vld [vmem:[%s192 + $0xc0] sm:$0xf]
        %v813 = vld [vmem:[%s192 + $0xc4] sm:$0xf]
        %v814 = vld [vmem:[%s192 + $0xc8] sm:$0xf]
        %v815 = vld [vmem:[%s192 + $0xcc] sm:$0xf]
        %v816 = vld [vmem:[%s192 + $0xd0] sm:$0xf]
        %v817 = vld [vmem:[%s192 + $0xd4] sm:$0xf]
        %v818 = vld [vmem:[%s192 + $0xd8] sm:$0xf]
        %v819 = vld [vmem:[%s192 + $0xdc] sm:$0xf]
        %v820 = vld [vmem:[%s192 + $0xe0] sm:$0xf]
        %v821 = vld [vmem:[%s192 + $0xe4] sm:$0xf]
        %v822 = vld [vmem:[%s192 + $0xe8] sm:$0xf]
        %v823 = vld [vmem:[%s192 + $0xec] sm:$0xf]
        %v824 = vld [vmem:[%s192 + $0xf0] sm:$0xf]
        %v825 = vld [vmem:[%s192 + $0xf4] sm:$0xf]
        %v826 = vld [vmem:[%s192 + $0xf8] sm:$0xf]
        %v827 = vld [vmem:[%s192 + $0xfc] sm:$0xf]
        %v828 = vld [vmem:[%s192 + $0x100] sm:$0xf]
        %v829 = vld [vmem:[%s192 + $0x104] sm:$0xf]
        %v830 = vld [vmem:[%s192 + $0x108] sm:$0xf]
        %v831 = vld [vmem:[%s192 + $0x10c] sm:$0xf]
        %v832 = vld [vmem:[%s192 + $0x110] sm:$0xf]
        %v833 = vld [vmem:[%s192 + $0x114] sm:$0xf]
        %v834 = vld [vmem:[%s192 + $0x118] sm:$0xf]
        %v835 = vld [vmem:[%s192 + $0x11c] sm:$0xf]
        %v836 = vld [vmem:[%s192 + $0x120] sm:$0xf]
        %v837 = vld [vmem:[%s192 + $0x124] sm:$0xf]
        %v838 = vld [vmem:[%s192 + $0x128] sm:$0xf]
        %v839 = vld [vmem:[%s192 + $0x12c] sm:$0xf]
        %v840 = vld [vmem:[%s192 + $0x130] sm:$0xf]
        %v841 = vld [vmem:[%s192 + $0x134] sm:$0xf]
        %v842 = vld [vmem:[%s192 + $0x138] sm:$0xf]
        %v843 = vld [vmem:[%s192 + $0x13c] sm:$0xf]
        %v844 = vld [vmem:[%s192 + $0x140] sm:$0xf]
        %v845 = vld [vmem:[%s192 + $0x144] sm:$0xf]
        %v846 = vld [vmem:[%s192 + $0x148] sm:$0xf]
        %v847 = vld [vmem:[%s192 + $0x14c] sm:$0xf]
        %v848 = vld [vmem:[%s192 + $0x150] sm:$0xf]
        %v849 = vld [vmem:[%s192 + $0x154] sm:$0xf]
        %v850 = vld [vmem:[%s192 + $0x158] sm:$0xf]
        %v851 = vld [vmem:[%s192 + $0x15c] sm:$0xf]
        %v852 = vld [vmem:[%s192 + $0x160] sm:$0xf]
        %v853 = vld [vmem:[%s192 + $0x164] sm:$0xf]
        %v854 = vld [vmem:[%s192 + $0x168] sm:$0xf]
        %v855 = vld [vmem:[%s192 + $0x16c] sm:$0xf]
        %v856 = vld [vmem:[%s192 + $0x170] sm:$0xf]
        %v857 = vld [vmem:[%s192 + $0x174] sm:$0xf]
        %v858 = vld [vmem:[%s192 + $0x178] sm:$0xf]
        %v859 = vld [vmem:[%s192 + $0x17c] sm:$0xf]
        %v908 = vunpack.c.l.b16 %v812
        %v909 = vunpack.c.l.b16 %v813
        %v910 = vunpack.c.l.b16 %v814
        %v911 = vunpack.c.l.b16 %v815
        %v912 = vunpack.c.l.b16 %v816
        %v913 = vunpack.c.l.b16 %v817
        %v914 = vunpack.c.l.b16 %v818
        %v915 = vunpack.c.l.b16 %v819
        %v916 = vunpack.c.l.b16 %v820
        %v917 = vunpack.c.l.b16 %v821
        %v918 = vunpack.c.l.b16 %v822
        %v919 = vunpack.c.l.b16 %v823
        %v920 = vunpack.c.l.b16 %v824
        %v921 = vunpack.c.l.b16 %v825
        %v922 = vunpack.c.l.b16 %v826
        %v923 = vunpack.c.l.b16 %v827
        %v924 = vunpack.c.l.b16 %v828
        %v925 = vunpack.c.l.b16 %v829
        %v926 = vunpack.c.l.b16 %v830
        %v927 = vunpack.c.l.b16 %v831
        %v928 = vunpack.c.l.b16 %v832
        %v929 = vunpack.c.l.b16 %v833
        %v930 = vunpack.c.l.b16 %v834
        %v931 = vunpack.c.l.b16 %v835
        %v932 = vunpack.c.l.b16 %v836
        %v933 = vunpack.c.l.b16 %v837
        %v934 = vunpack.c.l.b16 %v838
        %v935 = vunpack.c.l.b16 %v839
        %v936 = vunpack.c.l.b16 %v840
        %v937 = vunpack.c.l.b16 %v841
        %v938 = vunpack.c.l.b16 %v842
        %v939 = vunpack.c.l.b16 %v843
        %v940 = vunpack.c.l.b16 %v844
        %v941 = vunpack.c.l.b16 %v845
        %v942 = vunpack.c.l.b16 %v846
        %v943 = vunpack.c.l.b16 %v847
        %v944 = vunpack.c.l.b16 %v848
        %v945 = vunpack.c.l.b16 %v849
        %v946 = vunpack.c.l.b16 %v850
        %v947 = vunpack.c.l.b16 %v851
        %v948 = vunpack.c.l.b16 %v852
        %v949 = vunpack.c.l.b16 %v853
        %v950 = vunpack.c.l.b16 %v854
        %v951 = vunpack.c.l.b16 %v855
        %v952 = vunpack.c.l.b16 %v856
        %v953 = vunpack.c.l.b16 %v857
        %v954 = vunpack.c.l.b16 %v858
        %v955 = vunpack.c.l.b16 %v859
        %v956 = vpack.c.b16 %v909, %v908
        %v957 = vpack.c.b16 %v911, %v910
        %v958 = vpack.c.b16 %v913, %v912
        %v959 = vpack.c.b16 %v915, %v914
        %v960 = vpack.c.b16 %v917, %v916
        %v961 = vpack.c.b16 %v919, %v918
        %v962 = vpack.c.b16 %v921, %v920
        %v963 = vpack.c.b16 %v923, %v922
        %v964 = vpack.c.b16 %v925, %v924
        %v965 = vpack.c.b16 %v927, %v926
        %v966 = vpack.c.b16 %v929, %v928
        %v967 = vpack.c.b16 %v931, %v930
        %v968 = vpack.c.b16 %v933, %v932
        %v969 = vpack.c.b16 %v935, %v934
        %v970 = vpack.c.b16 %v937, %v936
        %v971 = vpack.c.b16 %v939, %v938
        %v972 = vpack.c.b16 %v941, %v940
        %v973 = vpack.c.b16 %v943, %v942
        %v974 = vpack.c.b16 %v945, %v944
        %v975 = vpack.c.b16 %v947, %v946
        %v976 = vpack.c.b16 %v949, %v948
        %v977 = vpack.c.b16 %v951, %v950
        %v978 = vpack.c.b16 %v953, %v952
        %v979 = vpack.c.b16 %v955, %v954
        %1004 = vmatprep.subr.bf16.mxu0 0
        %1005 = vmatpush1.bf16.msra.mxu0 %v956
        %1006 = vmatprep.subr.bf16.mxu0 0
        %1007 = vmatpush1.bf16.msra.mxu0 %v957
        %1008 = vmatprep.subr.bf16.mxu0 0
        %1009 = vmatpush1.bf16.msra.mxu0 %v958
        %1010 = vmatprep.subr.bf16.mxu0 0
        %1011 = vmatpush1.bf16.msra.mxu0 %v959
        %1012 = vmatprep.subr.bf16.mxu0 0
        %1013 = vmatpush1.bf16.msra.mxu0 %v960
        %1014 = vmatprep.subr.bf16.mxu0 0
        %1015 = vmatpush1.bf16.msra.mxu0 %v961
        %1016 = vmatprep.subr.bf16.mxu0 0
        %1017 = vmatpush1.bf16.msra.mxu0 %v962
        %1018 = vmatprep.subr.bf16.mxu0 0
        %1019 = vmatpush1.bf16.msra.mxu0 %v963
        %1020 = vmatprep.subr.bf16.mxu0 0
        %1021 = vmatpush1.bf16.msra.mxu0 %v964
        %1022 = vmatprep.subr.bf16.mxu0 0
        %1023 = vmatpush1.bf16.msra.mxu0 %v965
        %1024 = vmatprep.subr.bf16.mxu0 0
        %1025 = vmatpush1.bf16.msra.mxu0 %v966
        %1026 = vmatprep.subr.bf16.mxu0 0
        %1027 = vmatpush1.bf16.msra.mxu0 %v967
        %1028 = vmatprep.subr.bf16.mxu0 0
        %1029 = vmatpush1.bf16.msra.mxu0 %v968
        %1030 = vmatprep.subr.bf16.mxu0 0
        %1031 = vmatpush1.bf16.msra.mxu0 %v969
        %1032 = vmatprep.subr.bf16.mxu0 0
        %1033 = vmatpush1.bf16.msra.mxu0 %v970
        %1034 = vmatprep.subr.bf16.mxu0 0
        %1035 = vmatpush1.bf16.msra.mxu0 %v971
        %1036 = vmatprep.mubr.bf16.mxu0 %v663
        %1037 = vmatmul.mubr.bf16.gmra.mrb[0].mxu0 %v612
        %v1038 = vpop.f32.mrb[0].mxu0
        %v1039 = vadd.f32 0.0, %v1038
        %v1040 = vpop.f32.mrb[0].mxu0
        %v1041 = vpop.f32.mrb[0].mxu0
        %v1042 = vadd.f32 0.0, %v1041
        %v1043 = vpop.f32.mrb[0].mxu0
        %1044 = vmatprep.mubr.bf16.mxu0 %v675
        %1045 = vmatmul.mubr.bf16.gmra.mrb[0].mxu0 %v613
        %v1046 = vpop.f32.mrb[0].mxu0
        %v1047 = vadd.f32 0.0, %v1046
        %v1048 = vpop.f32.mrb[0].mxu0
        %v1049 = vpop.f32.mrb[0].mxu0
        %v1050 = vadd.f32 0.0, %v1049
        %v1051 = vpop.f32.mrb[0].mxu0
        %1052 = vmatprep.mubr.bf16.mxu0 %v687
        %1053 = vmatmul.mubr.bf16.gmra.mrb[0].mxu0 %v614
        %v1054 = vpop.f32.mrb[0].mxu0
        %v1055 = vadd.f32 0.0, %v1054
        %v1056 = vpop.f32.mrb[0].mxu0
        %v1057 = vpop.f32.mrb[0].mxu0
        %v1058 = vadd.f32 0.0, %v1057
        %v1059 = vpop.f32.mrb[0].mxu0
        %1060 = vmatprep.mubr.bf16.mxu0 %v699
        %1061 = vmatmul.mubr.bf16.gmra.mrb[0].mxu0 %v615
        %v1062 = vpop.f32.mrb[0].mxu0
        %v1063 = vadd.f32 0.0, %v1062
        %v1064 = vpop.f32.mrb[0].mxu0
        %v1065 = vpop.f32.mrb[0].mxu0
        %v1066 = vadd.f32 0.0, %v1065
        %v1067 = vpop.f32.mrb[0].mxu0
        %1068 = vmatprep.mubr.bf16.mxu0 %v711
        %1069 = vmatmul.mubr.bf16.gmra.mrb[0].mxu0 %v616
        %v1070 = vpop.f32.mrb[0].mxu0
        %v1071 = vadd.f32 0.0, %v1070
        %v1072 = vpop.f32.mrb[0].mxu0
        %v1073 = vpop.f32.mrb[0].mxu0
        %v1074 = vadd.f32 0.0, %v1073
        %v1075 = vpop.f32.mrb[0].mxu0
        %1076 = vmatprep.mubr.bf16.mxu0 %v723
        %1077 = vmatmul.mubr.bf16.gmra.mrb[0].mxu0 %v617
        %v1078 = vpop.f32.mrb[0].mxu0
        %v1079 = vadd.f32 0.0, %v1078
        %v1080 = vpop.f32.mrb[0].mxu0
        %v1081 = vpop.f32.mrb[0].mxu0
        %v1082 = vadd.f32 0.0, %v1081
        %v1083 = vpop.f32.mrb[0].mxu0
        %1084 = vmatprep.mubr.bf16.mxu0 %v735
        %1085 = vmatmul.mubr.bf16.gmra.mrb[0].mxu0 %v618
        %v1086 = vpop.f32.mrb[0].mxu0
        %v1087 = vadd.f32 0.0, %v1086
        %v1088 = vpop.f32.mrb[0].mxu0
        %v1089 = vpop.f32.mrb[0].mxu0
        %v1090 = vadd.f32 0.0, %v1089
        %v1091 = vpop.f32.mrb[0].mxu0
        %1092 = vmatprep.mubr.bf16.mxu0 %v747
        %1093 = vmatmul.mubr.bf16.gmra.mrb[0].mxu0 %v619
        %v1094 = vpop.f32.mrb[0].mxu0
        %v1095 = vadd.f32 0.0, %v1094
        %v1096 = vpop.f32.mrb[0].mxu0
        %v1097 = vpop.f32.mrb[0].mxu0
        %v1098 = vadd.f32 0.0, %v1097
        %v1099 = vpop.f32.mrb[0].mxu0
        %1100 = vdwg.mxu0
        %1101 = vmatprep.subr.bf16.mxu0 0
        %1102 = vmatpush1.bf16.msra.mxu0 %v972
        %1103 = vmatprep.subr.bf16.mxu0 0
        %1104 = vmatpush1.bf16.msra.mxu0 %v973
        %1105 = vmatprep.subr.bf16.mxu0 0
        %1106 = vmatpush1.bf16.msra.mxu0 %v974
        %1107 = vmatprep.subr.bf16.mxu0 0
        %1108 = vmatpush1.bf16.msra.mxu0 %v975
        %1109 = vmatprep.subr.bf16.mxu0 0
        %1110 = vmatpush1.bf16.msra.mxu0 %v976
        %1111 = vmatprep.subr.bf16.mxu0 0
        %1112 = vmatpush1.bf16.msra.mxu0 %v977
        %1113 = vmatprep.subr.bf16.mxu0 0
        %1114 = vmatpush1.bf16.msra.mxu0 %v978
        %1115 = vmatprep.subr.bf16.mxu0 0
        %1116 = vmatpush1.bf16.msra.mxu0 %v979
        %1117 = vmatprep.subr.bf16.mxu0 0
        %1118 = vmatpush1.bf16.msra.mxu0 0
        %1119 = vmatprep.subr.bf16.mxu0 0
        %1120 = vmatpush1.bf16.msra.mxu0 0
        %1121 = vmatprep.subr.bf16.mxu0 0
        %1122 = vmatpush1.bf16.msra.mxu0 0
        %1123 = vmatprep.subr.bf16.mxu0 0
        %1124 = vmatpush1.bf16.msra.mxu0 0
        %1125 = vmatprep.subr.bf16.mxu0 0
        %1126 = vmatpush1.bf16.msra.mxu0 0
        %1127 = vmatprep.subr.bf16.mxu0 0
        %1128 = vmatpush1.bf16.msra.mxu0 0
        %1129 = vmatprep.subr.bf16.mxu0 0
        %1130 = vmatpush1.bf16.msra.mxu0 0
        %1131 = vmatprep.subr.bf16.mxu0 0
        %1132 = vmatpush1.bf16.msra.mxu0 0
        %1133 = vmatprep.mubr.bf16.mxu0 0
        %1134 = vmatmul.mubr.bf16.gmra.mrb[0].mxu0 %v782
        %v1135 = vpop.f32.mrb[0].mxu0
        %v1136 = vadd.f32 %v1039, %v1135
        %v1137 = vpop.f32.mrb[0].mxu0
        %v1138 = vpop.f32.mrb[0].mxu0
        %v1139 = vadd.f32 %v1042, %v1138
        %v1140 = vpop.f32.mrb[0].mxu0
        %1141 = vmatprep.mubr.bf16.mxu0 0
        %1142 = vmatmul.mubr.bf16.gmra.mrb[0].mxu0 %v785
        %v1143 = vpop.f32.mrb[0].mxu0
        %v1144 = vadd.f32 %v1047, %v1143
        %v1145 = vpop.f32.mrb[0].mxu0
        %v1146 = vpop.f32.mrb[0].mxu0
        %v1147 = vadd.f32 %v1050, %v1146
        %v1148 = vpop.f32.mrb[0].mxu0
        %1149 = vmatprep.mubr.bf16.mxu0 0
        %1150 = vmatmul.mubr.bf16.gmra.mrb[0].mxu0 %v788
        %v1151 = vpop.f32.mrb[0].mxu0
        %v1152 = vadd.f32 %v1055, %v1151
        %v1153 = vpop.f32.mrb[0].mxu0
        %v1154 = vpop.f32.mrb[0].mxu0
        %v1155 = vadd.f32 %v1058, %v1154
        %v1156 = vpop.f32.mrb[0].mxu0
        %1157 = vmatprep.mubr.bf16.mxu0 0
        %1158 = vmatmul.mubr.bf16.gmra.mrb[0].mxu0 %v791
        %v1159 = vpop.f32.mrb[0].mxu0
        %v1160 = vadd.f32 %v1063, %v1159
        %v1161 = vpop.f32.mrb[0].mxu0
        %v1162 = vpop.f32.mrb[0].mxu0
        %v1163 = vadd.f32 %v1066, %v1162
        %v1164 = vpop.f32.mrb[0].mxu0
        %1165 = vmatprep.mubr.bf16.mxu0 0
        %1166 = vmatmul.mubr.bf16.gmra.mrb[0].mxu0 %v794
        %v1167 = vpop.f32.mrb[0].mxu0
        %v1168 = vadd.f32 %v1071, %v1167
        %v1169 = vpop.f32.mrb[0].mxu0
        %v1170 = vpop.f32.mrb[0].mxu0
        %v1171 = vadd.f32 %v1074, %v1170
        %v1172 = vpop.f32.mrb[0].mxu0
        %1173 = vmatprep.mubr.bf16.mxu0 0
        %1174 = vmatmul.mubr.bf16.gmra.mrb[0].mxu0 %v797
        %v1175 = vpop.f32.mrb[0].mxu0
        %v1176 = vadd.f32 %v1079, %v1175
        %v1177 = vpop.f32.mrb[0].mxu0
        %v1178 = vpop.f32.mrb[0].mxu0
        %v1179 = vadd.f32 %v1082, %v1178
        %v1180 = vpop.f32.mrb[0].mxu0
        %1181 = vmatprep.mubr.bf16.mxu0 0
        %1182 = vmatmul.mubr.bf16.gmra.mrb[0].mxu0 %v800
        %v1183 = vpop.f32.mrb[0].mxu0
        %v1184 = vadd.f32 %v1087, %v1183
        %v1185 = vpop.f32.mrb[0].mxu0
        %v1186 = vpop.f32.mrb[0].mxu0
        %v1187 = vadd.f32 %v1090, %v1186
        %v1188 = vpop.f32.mrb[0].mxu0
        %1189 = vmatprep.mubr.bf16.mxu0 0
        %1190 = vmatmul.mubr.bf16.gmra.mrb[0].mxu0 %v803
        %v1191 = vpop.f32.mrb[0].mxu0
        %v1192 = vadd.f32 %v1095, %v1191
        %v1193 = vpop.f32.mrb[0].mxu0
        %v1194 = vpop.f32.mrb[0].mxu0
        %v1195 = vadd.f32 %v1098, %v1194
        %v1196 = vpop.f32.mrb[0].mxu0
        %1197 = vdwg.mxu0
        %v1246 = vunpack.c.l.b16 %v499
        %v1247 = vunpack.c.l.b16 %v500
        %v1248 = vunpack.c.l.b16 %v501
        %v1249 = vunpack.c.l.b16 %v502
        %v1250 = vunpack.c.l.b16 %v503
        %v1251 = vunpack.c.l.b16 %v504
        %v1252 = vunpack.c.l.b16 %v505
        %v1253 = vunpack.c.l.b16 %v506
        %v1254 = vunpack.c.l.b16 %v507
        %v1255 = vunpack.c.l.b16 %v508
        %v1256 = vunpack.c.l.b16 %v509
        %v1257 = vunpack.c.l.b16 %v510
        %v1258 = vunpack.c.l.b16 %v511
        %v1259 = vunpack.c.l.b16 %v512
        %v1260 = vunpack.c.l.b16 %v513
        %v1261 = vunpack.c.l.b16 %v514
        %v1262 = vunpack.c.l.b16 %v515
        %v1263 = vunpack.c.l.b16 %v516
        %v1264 = vunpack.c.l.b16 %v517
        %v1265 = vunpack.c.l.b16 %v518
        %v1266 = vunpack.c.l.b16 %v519
        %v1267 = vunpack.c.l.b16 %v520
        %v1268 = vunpack.c.l.b16 %v521
        %v1269 = vunpack.c.l.b16 %v522
        %v1270 = vunpack.c.l.b16 %v523
        %v1271 = vunpack.c.l.b16 %v524
        %v1272 = vunpack.c.l.b16 %v525
        %v1273 = vunpack.c.l.b16 %v526
        %v1274 = vunpack.c.l.b16 %v527
        %v1275 = vunpack.c.l.b16 %v528
        %v1276 = vunpack.c.l.b16 %v529
        %v1277 = vunpack.c.l.b16 %v530
        %v1278 = vunpack.c.l.b16 %v531
        %v1279 = vunpack.c.l.b16 %v532
        %v1280 = vunpack.c.l.b16 %v533
        %v1281 = vunpack.c.l.b16 %v534
        %v1282 = vunpack.c.l.b16 %v535
        %v1283 = vunpack.c.l.b16 %v536
        %v1284 = vunpack.c.l.b16 %v537
        %v1285 = vunpack.c.l.b16 %v538
        %v1286 = vunpack.c.l.b16 %v539
        %v1287 = vunpack.c.l.b16 %v540
        %v1288 = vunpack.c.l.b16 %v541
        %v1289 = vunpack.c.l.b16 %v542
        %v1290 = vunpack.c.l.b16 %v543
        %v1291 = vunpack.c.l.b16 %v544
        %v1292 = vunpack.c.l.b16 %v545
        %v1293 = vunpack.c.l.b16 %v546
        %v1294 = vpack.c.b16 %v1247, %v1246
        %v1295 = vpack.c.b16 %v1249, %v1248
        %v1296 = vpack.c.b16 %v1251, %v1250
        %v1297 = vpack.c.b16 %v1253, %v1252
        %v1298 = vpack.c.b16 %v1255, %v1254
        %v1299 = vpack.c.b16 %v1257, %v1256
        %v1300 = vpack.c.b16 %v1259, %v1258
        %v1301 = vpack.c.b16 %v1261, %v1260
        %v1302 = vpack.c.b16 %v1263, %v1262
        %v1303 = vpack.c.b16 %v1265, %v1264
        %v1304 = vpack.c.b16 %v1267, %v1266
        %v1305 = vpack.c.b16 %v1269, %v1268
        %v1306 = vpack.c.b16 %v1271, %v1270
        %v1307 = vpack.c.b16 %v1273, %v1272
        %v1308 = vpack.c.b16 %v1275, %v1274
        %v1309 = vpack.c.b16 %v1277, %v1276
        %v1310 = vpack.c.b16 %v1279, %v1278
        %v1311 = vpack.c.b16 %v1281, %v1280
        %v1312 = vpack.c.b16 %v1283, %v1282
        %v1313 = vpack.c.b16 %v1285, %v1284
        %v1314 = vpack.c.b16 %v1287, %v1286
        %v1315 = vpack.c.b16 %v1289, %v1288
        %v1316 = vpack.c.b16 %v1291, %v1290
        %v1317 = vpack.c.b16 %v1293, %v1292
        %1342 = vmatprep.subr.bf16.mxu0 0
        %1343 = vmatpush1.bf16.msra.mxu0 %v1294
        %1344 = vmatprep.subr.bf16.mxu0 0
        %1345 = vmatpush1.bf16.msra.mxu0 %v1295
        %1346 = vmatprep.subr.bf16.mxu0 0
        %1347 = vmatpush1.bf16.msra.mxu0 %v1296
        %1348 = vmatprep.subr.bf16.mxu0 0
        %1349 = vmatpush1.bf16.msra.mxu0 %v1297
        %1350 = vmatprep.subr.bf16.mxu0 0
        %1351 = vmatpush1.bf16.msra.mxu0 %v1298
        %1352 = vmatprep.subr.bf16.mxu0 0
        %1353 = vmatpush1.bf16.msra.mxu0 %v1299
        %1354 = vmatprep.subr.bf16.mxu0 0
        %1355 = vmatpush1.bf16.msra.mxu0 %v1300
        %1356 = vmatprep.subr.bf16.mxu0 0
        %1357 = vmatpush1.bf16.msra.mxu0 %v1301
        %1358 = vmatprep.subr.bf16.mxu0 0
        %1359 = vmatpush1.bf16.msra.mxu0 %v1302
        %1360 = vmatprep.subr.bf16.mxu0 0
        %1361 = vmatpush1.bf16.msra.mxu0 %v1303
        %1362 = vmatprep.subr.bf16.mxu0 0
        %1363 = vmatpush1.bf16.msra.mxu0 %v1304
        %1364 = vmatprep.subr.bf16.mxu0 0
        %1365 = vmatpush1.bf16.msra.mxu0 %v1305
        %1366 = vmatprep.subr.bf16.mxu0 0
        %1367 = vmatpush1.bf16.msra.mxu0 %v1306
        %1368 = vmatprep.subr.bf16.mxu0 0
        %1369 = vmatpush1.bf16.msra.mxu0 %v1307
        %1370 = vmatprep.subr.bf16.mxu0 0
        %1371 = vmatpush1.bf16.msra.mxu0 %v1308
        %1372 = vmatprep.subr.bf16.mxu0 0
        %1373 = vmatpush1.bf16.msra.mxu0 %v1309
        %1374 = vmatprep.mubr.bf16.mxu0 %v349
        %1375 = vmatmul.mubr.bf16.gmra.mrb[0].mxu0 %v297
        %v1376 = vpop.f32.mrb[0].mxu0
        %v1377 = vadd.f32 %v1136, %v1376
        %v1378 = vpop.f32.mrb[0].mxu0
        %v1379 = vpop.f32.mrb[0].mxu0
        %v1380 = vadd.f32 %v1139, %v1379
        %v1381 = vpop.f32.mrb[0].mxu0
        %1382 = vmatprep.mubr.bf16.mxu0 %v361
        %1383 = vmatmul.mubr.bf16.gmra.mrb[0].mxu0 %v298
        %v1384 = vpop.f32.mrb[0].mxu0
        %v1385 = vadd.f32 %v1144, %v1384
        %v1386 = vpop.f32.mrb[0].mxu0
        %v1387 = vpop.f32.mrb[0].mxu0
        %v1388 = vadd.f32 %v1147, %v1387
        %v1389 = vpop.f32.mrb[0].mxu0
        %1390 = vmatprep.mubr.bf16.mxu0 %v373
        %1391 = vmatmul.mubr.bf16.gmra.mrb[0].mxu0 %v299
        %v1392 = vpop.f32.mrb[0].mxu0
        %v1393 = vadd.f32 %v1152, %v1392
        %v1394 = vpop.f32.mrb[0].mxu0
        %v1395 = vpop.f32.mrb[0].mxu0
        %v1396 = vadd.f32 %v1155, %v1395
        %v1397 = vpop.f32.mrb[0].mxu0
        %1398 = vmatprep.mubr.bf16.mxu0 %v385
        %1399 = vmatmul.mubr.bf16.gmra.mrb[0].mxu0 %v300
        %v1400 = vpop.f32.mrb[0].mxu0
        %v1401 = vadd.f32 %v1160, %v1400
        %v1402 = vpop.f32.mrb[0].mxu0
        %v1403 = vpop.f32.mrb[0].mxu0
        %v1404 = vadd.f32 %v1163, %v1403
        %v1405 = vpop.f32.mrb[0].mxu0
        %1406 = vmatprep.mubr.bf16.mxu0 %v397
        %1407 = vmatmul.mubr.bf16.gmra.mrb[0].mxu0 %v301
        %v1408 = vpop.f32.mrb[0].mxu0
        %v1409 = vadd.f32 %v1168, %v1408
        %v1410 = vpop.f32.mrb[0].mxu0
        %v1411 = vpop.f32.mrb[0].mxu0
        %v1412 = vadd.f32 %v1171, %v1411
        %v1413 = vpop.f32.mrb[0].mxu0
        %1414 = vmatprep.mubr.bf16.mxu0 %v409
        %1415 = vmatmul.mubr.bf16.gmra.mrb[0].mxu0 %v302
        %v1416 = vpop.f32.mrb[0].mxu0
        %v1417 = vadd.f32 %v1176, %v1416
        %v1418 = vpop.f32.mrb[0].mxu0
        %v1419 = vpop.f32.mrb[0].mxu0
        %v1420 = vadd.f32 %v1179, %v1419
        %v1421 = vpop.f32.mrb[0].mxu0
        %1422 = vmatprep.mubr.bf16.mxu0 %v421
        %1423 = vmatmul.mubr.bf16.gmra.mrb[0].mxu0 %v303
        %v1424 = vpop.f32.mrb[0].mxu0
        %v1425 = vadd.f32 %v1184, %v1424
        %v1426 = vpop.f32.mrb[0].mxu0
        %v1427 = vpop.f32.mrb[0].mxu0
        %v1428 = vadd.f32 %v1187, %v1427
        %v1429 = vpop.f32.mrb[0].mxu0
        %1430 = vmatprep.mubr.bf16.mxu0 %v433
        %1431 = vmatmul.mubr.bf16.gmra.mrb[0].mxu0 %v304
        %v1432 = vpop.f32.mrb[0].mxu0
        %v1433 = vadd.f32 %v1192, %v1432
        %v1434 = vpop.f32.mrb[0].mxu0
        %v1435 = vpop.f32.mrb[0].mxu0
        %v1436 = vadd.f32 %v1195, %v1435
        %v1437 = vpop.f32.mrb[0].mxu0
        %1438 = vdwg.mxu0
        %1439 = vmatprep.subr.bf16.mxu0 0
        %1440 = vmatpush1.bf16.msra.mxu0 %v1310
        %1441 = vmatprep.subr.bf16.mxu0 0
        %1442 = vmatpush1.bf16.msra.mxu0 %v1311
        %1443 = vmatprep.subr.bf16.mxu0 0
        %1444 = vmatpush1.bf16.msra.mxu0 %v1312
        %1445 = vmatprep.subr.bf16.mxu0 0
        %1446 = vmatpush1.bf16.msra.mxu0 %v1313
        %1447 = vmatprep.subr.bf16.mxu0 0
        %1448 = vmatpush1.bf16.msra.mxu0 %v1314
        %1449 = vmatprep.subr.bf16.mxu0 0
        %1450 = vmatpush1.bf16.msra.mxu0 %v1315
        %1451 = vmatprep.subr.bf16.mxu0 0
        %1452 = vmatpush1.bf16.msra.mxu0 %v1316
        %1453 = vmatprep.subr.bf16.mxu0 0
        %1454 = vmatpush1.bf16.msra.mxu0 %v1317
        %1455 = vmatprep.subr.bf16.mxu0 0
        %1456 = vmatpush1.bf16.msra.mxu0 0
        %1457 = vmatprep.subr.bf16.mxu0 0
        %1458 = vmatpush1.bf16.msra.mxu0 0
        %1459 = vmatprep.subr.bf16.mxu0 0
        %1460 = vmatpush1.bf16.msra.mxu0 0
        %1461 = vmatprep.subr.bf16.mxu0 0
        %1462 = vmatpush1.bf16.msra.mxu0 0
        %1463 = vmatprep.subr.bf16.mxu0 0
        %1464 = vmatpush1.bf16.msra.mxu0 0
        %1465 = vmatprep.subr.bf16.mxu0 0
        %1466 = vmatpush1.bf16.msra.mxu0 0
        %1467 = vmatprep.subr.bf16.mxu0 0
        %1468 = vmatpush1.bf16.msra.mxu0 0
        %1469 = vmatprep.subr.bf16.mxu0 0
        %1470 = vmatpush1.bf16.msra.mxu0 0
        %1471 = vmatprep.mubr.bf16.mxu0 0
        %1472 = vmatmul.mubr.bf16.gmra.mrb[0].mxu0 %v469
        %v1473 = vpop.f32.mrb[0].mxu0
        %v1474 = vadd.f32 %v1377, %v1473
        %v1475 = vpop.f32.mrb[0].mxu0
        %v1476 = vpop.f32.mrb[0].mxu0
        %v1477 = vadd.f32 %v1380, %v1476
        %v1478 = vpop.f32.mrb[0].mxu0
        %1479 = vmatprep.mubr.bf16.mxu0 0
        %1480 = vmatmul.mubr.bf16.gmra.mrb[0].mxu0 %v472
        %v1481 = vpop.f32.mrb[0].mxu0
        %v1482 = vadd.f32 %v1385, %v1481
        %v1483 = vpop.f32.mrb[0].mxu0
        %v1484 = vpop.f32.mrb[0].mxu0
        %v1485 = vadd.f32 %v1388, %v1484
        %v1486 = vpop.f32.mrb[0].mxu0
        %1487 = vmatprep.mubr.bf16.mxu0 0
        %1488 = vmatmul.mubr.bf16.gmra.mrb[0].mxu0 %v475
        %v1489 = vpop.f32.mrb[0].mxu0
        %v1490 = vadd.f32 %v1393, %v1489
        %v1491 = vpop.f32.mrb[0].mxu0
        %v1492 = vpop.f32.mrb[0].mxu0
        %v1493 = vadd.f32 %v1396, %v1492
        %v1494 = vpop.f32.mrb[0].mxu0
        %1495 = vmatprep.mubr.bf16.mxu0 0
        %1496 = vmatmul.mubr.bf16.gmra.mrb[0].mxu0 %v478
        %v1497 = vpop.f32.mrb[0].mxu0
        %v1498 = vadd.f32 %v1401, %v1497
        %v1499 = vpop.f32.mrb[0].mxu0
        %v1500 = vpop.f32.mrb[0].mxu0
        %v1501 = vadd.f32 %v1404, %v1500
        %v1502 = vpop.f32.mrb[0].mxu0
        %1503 = vmatprep.mubr.bf16.mxu0 0
        %1504 = vmatmul.mubr.bf16.gmra.mrb[0].mxu0 %v481
        %v1505 = vpop.f32.mrb[0].mxu0
        %v1506 = vadd.f32 %v1409, %v1505
        %v1507 = vpop.f32.mrb[0].mxu0
        %v1508 = vpop.f32.mrb[0].mxu0
        %v1509 = vadd.f32 %v1412, %v1508
        %v1510 = vpop.f32.mrb[0].mxu0
        %1511 = vmatprep.mubr.bf16.mxu0 0
        %1512 = vmatmul.mubr.bf16.gmra.mrb[0].mxu0 %v484
        %v1513 = vpop.f32.mrb[0].mxu0
        %v1514 = vadd.f32 %v1417, %v1513
        %v1515 = vpop.f32.mrb[0].mxu0
        %v1516 = vpop.f32.mrb[0].mxu0
        %v1517 = vadd.f32 %v1420, %v1516
        %v1518 = vpop.f32.mrb[0].mxu0
        %1519 = vmatprep.mubr.bf16.mxu0 0
        %1520 = vmatmul.mubr.bf16.gmra.mrb[0].mxu0 %v487
        %v1521 = vpop.f32.mrb[0].mxu0
        %v1522 = vadd.f32 %v1425, %v1521
        %v1523 = vpop.f32.mrb[0].mxu0
        %v1524 = vpop.f32.mrb[0].mxu0
        %v1525 = vadd.f32 %v1428, %v1524
        %v1526 = vpop.f32.mrb[0].mxu0
        %1527 = vmatprep.mubr.bf16.mxu0 0
        %1528 = vmatmul.mubr.bf16.gmra.mrb[0].mxu0 %v490
        %v1529 = vpop.f32.mrb[0].mxu0
        %v1530 = vadd.f32 %v1433, %v1529
        %v1531 = vpop.f32.mrb[0].mxu0
        %v1532 = vpop.f32.mrb[0].mxu0
        %v1533 = vadd.f32 %v1436, %v1532
        %v1534 = vpop.f32.mrb[0].mxu0
        %1535 = vdwg.mxu0
        %s1536 = scalar_lea.vmem %s230, 24
        %v1537 = vld [vmem:[%s1536] sm:$0xf]
        %v1538 = vld [vmem:[%s1536 + $0x4] sm:$0xf]
        %v1539 = vld [vmem:[%s1536 + $0xc] sm:$0xf]
        %v1540 = vld [vmem:[%s1536 + $0x10] sm:$0xf]
        %v1541 = vld [vmem:[%s1536 + $0x18] sm:$0xf]
        %v1542 = vld [vmem:[%s1536 + $0x1c] sm:$0xf]
        %v1543 = vld [vmem:[%s1536 + $0x24] sm:$0xf]
        %v1544 = vld [vmem:[%s1536 + $0x28] sm:$0xf]
        %v1545 = vld [vmem:[%s1536 + $0x30] sm:$0xf]
        %v1546 = vld [vmem:[%s1536 + $0x34] sm:$0xf]
        %v1547 = vld [vmem:[%s1536 + $0x3c] sm:$0xf]
        %v1548 = vld [vmem:[%s1536 + $0x40] sm:$0xf]
        %v1549 = vld [vmem:[%s1536 + $0x48] sm:$0xf]
        %v1550 = vld [vmem:[%s1536 + $0x4c] sm:$0xf]
        %v1551 = vld [vmem:[%s1536 + $0x54] sm:$0xf]
        %v1552 = vld [vmem:[%s1536 + $0x58] sm:$0xf]
        %v1553 = vld [vmem:[%s1536 + $0x8] sm:$0x1]
        %v1554 = vld [vmem:[%s1536 + $0x14] sm:$0x1]
        %v1555 = vld [vmem:[%s1536 + $0x20] sm:$0x1]
        %v1556 = vld [vmem:[%s1536 + $0x2c] sm:$0x1]
        %v1557 = vld [vmem:[%s1536 + $0x38] sm:$0x1]
        %v1558 = vld [vmem:[%s1536 + $0x44] sm:$0x1]
        %v1559 = vld [vmem:[%s1536 + $0x50] sm:$0x1]
        %v1560 = vld [vmem:[%s1536 + $0x5c] sm:$0x1]
        %v1561 = vld [vmem:[%s1536] sm:$0xe]
        %v1562 = vld [vmem:[%s1536 + $0xc] sm:$0xe]
        %v1563 = vld [vmem:[%s1536 + $0x18] sm:$0xe]
        %v1564 = vld [vmem:[%s1536 + $0x24] sm:$0xe]
        %v1565 = vld [vmem:[%s1536 + $0x30] sm:$0xe]
        %v1566 = vld [vmem:[%s1536 + $0x3c] sm:$0xe]
        %v1567 = vld [vmem:[%s1536 + $0x48] sm:$0xe]
        %v1568 = vld [vmem:[%s1536 + $0x54] sm:$0xe]
        %v1585 = vunpack.c.l.b16 %v1537
        %v1586 = vunpack.c.l.b16 %v1538
        %v1587 = vunpack.c.l.b16 %v1539
        %v1588 = vunpack.c.l.b16 %v1540
        %v1589 = vunpack.c.l.b16 %v1541
        %v1590 = vunpack.c.l.b16 %v1542
        %v1591 = vunpack.c.l.b16 %v1543
        %v1592 = vunpack.c.l.b16 %v1544
        %v1593 = vunpack.c.l.b16 %v1545
        %v1594 = vunpack.c.l.b16 %v1546
        %v1595 = vunpack.c.l.b16 %v1547
        %v1596 = vunpack.c.l.b16 %v1548
        %v1597 = vunpack.c.l.b16 %v1549
        %v1598 = vunpack.c.l.b16 %v1550
        %v1599 = vunpack.c.l.b16 %v1551
        %v1600 = vunpack.c.l.b16 %v1552
        %v1601 = vpack.c.b16 %v1586, %v1585
        %v1602 = vpack.c.b16 %v1588, %v1587
        %v1603 = vpack.c.b16 %v1590, %v1589
        %v1604 = vpack.c.b16 %v1592, %v1591
        %v1605 = vpack.c.b16 %v1594, %v1593
        %v1606 = vpack.c.b16 %v1596, %v1595
        %v1607 = vpack.c.b16 %v1598, %v1597
        %v1608 = vpack.c.b16 %v1600, %v1599
        %v1625 = vunpack.c.l.b16 %v1553
        %v1626 = vunpack.c.l.b16 %v1554
        %v1627 = vunpack.c.l.b16 %v1555
        %v1628 = vunpack.c.l.b16 %v1556
        %v1629 = vunpack.c.l.b16 %v1557
        %v1630 = vunpack.c.l.b16 %v1558
        %v1631 = vunpack.c.l.b16 %v1559
        %v1632 = vunpack.c.l.b16 %v1560
        %v1633 = vpack.c.b16 %v1625, %v1625
        %v1634 = vpack.c.b16 %v1626, %v1626
        %v1635 = vpack.c.b16 %v1627, %v1627
        %v1636 = vpack.c.b16 %v1628, %v1628
        %v1637 = vpack.c.b16 %v1629, %v1629
        %v1638 = vpack.c.b16 %v1630, %v1630
        %v1639 = vpack.c.b16 %v1631, %v1631
        %v1640 = vpack.c.b16 %v1632, %v1632
        %v1642 = vshrl.u32 %v1601, 16
        %v1644 = vshll.u32 %v1601, 16
        %v1646 = vrot.slane %v1644, 1
        %v1647 = vor.u32 %v1642, %v1646
        %v1649 = vshll.u32 %v1633, 16
        %v1651 = vrot.slane %v1649, 1
        %v1652 = vsel %vm337, %v1647, %v1651
        %v1654 = vshrl.u32 %v1602, 16
        %v1656 = vshll.u32 %v1602, 16
        %v1658 = vrot.slane %v1656, 1
        %v1659 = vor.u32 %v1654, %v1658
        %v1661 = vshll.u32 %v1634, 16
        %v1663 = vrot.slane %v1661, 1
        %v1664 = vsel %vm337, %v1659, %v1663
        %v1666 = vshrl.u32 %v1603, 16
        %v1668 = vshll.u32 %v1603, 16
        %v1670 = vrot.slane %v1668, 1
        %v1671 = vor.u32 %v1666, %v1670
        %v1673 = vshll.u32 %v1635, 16
        %v1675 = vrot.slane %v1673, 1
        %v1676 = vsel %vm337, %v1671, %v1675
        %v1678 = vshrl.u32 %v1604, 16
        %v1680 = vshll.u32 %v1604, 16
        %v1682 = vrot.slane %v1680, 1
        %v1683 = vor.u32 %v1678, %v1682
        %v1685 = vshll.u32 %v1636, 16
        %v1687 = vrot.slane %v1685, 1
        %v1688 = vsel %vm337, %v1683, %v1687
        %v1690 = vshrl.u32 %v1605, 16
        %v1692 = vshll.u32 %v1605, 16
        %v1694 = vrot.slane %v1692, 1
        %v1695 = vor.u32 %v1690, %v1694
        %v1697 = vshll.u32 %v1637, 16
        %v1699 = vrot.slane %v1697, 1
        %v1700 = vsel %vm337, %v1695, %v1699
        %v1702 = vshrl.u32 %v1606, 16
        %v1704 = vshll.u32 %v1606, 16
        %v1706 = vrot.slane %v1704, 1
        %v1707 = vor.u32 %v1702, %v1706
        %v1709 = vshll.u32 %v1638, 16
        %v1711 = vrot.slane %v1709, 1
        %v1712 = vsel %vm337, %v1707, %v1711
        %v1714 = vshrl.u32 %v1607, 16
        %v1716 = vshll.u32 %v1607, 16
        %v1718 = vrot.slane %v1716, 1
        %v1719 = vor.u32 %v1714, %v1718
        %v1721 = vshll.u32 %v1639, 16
        %v1723 = vrot.slane %v1721, 1
        %v1724 = vsel %vm337, %v1719, %v1723
        %v1726 = vshrl.u32 %v1608, 16
        %v1728 = vshll.u32 %v1608, 16
        %v1730 = vrot.slane %v1728, 1
        %v1731 = vor.u32 %v1726, %v1730
        %v1733 = vshll.u32 %v1640, 16
        %v1735 = vrot.slane %v1733, 1
        %v1736 = vsel %vm337, %v1731, %v1735
        %v1753 = vunpack.c.l.b16 %v1561
        %v1754 = vunpack.c.l.b16 %v1562
        %v1755 = vunpack.c.l.b16 %v1563
        %v1756 = vunpack.c.l.b16 %v1564
        %v1757 = vunpack.c.l.b16 %v1565
        %v1758 = vunpack.c.l.b16 %v1566
        %v1759 = vunpack.c.l.b16 %v1567
        %v1760 = vunpack.c.l.b16 %v1568
        %v1761 = vpack.c.b16 %v1586, %v1753
        %v1762 = vpack.c.b16 %v1588, %v1754
        %v1763 = vpack.c.b16 %v1590, %v1755
        %v1764 = vpack.c.b16 %v1592, %v1756
        %v1765 = vpack.c.b16 %v1594, %v1757
        %v1766 = vpack.c.b16 %v1596, %v1758
        %v1767 = vpack.c.b16 %v1598, %v1759
        %v1768 = vpack.c.b16 %v1600, %v1760
        %v1769 = vrot.slane %v1761, 1
        %v1770 = vrot.slane %v1633, 1
        %v1771 = vsel %vm466, %v1769, %v1770
        %v1772 = vrot.slane %v1762, 1
        %v1773 = vrot.slane %v1634, 1
        %v1774 = vsel %vm466, %v1772, %v1773
        %v1775 = vrot.slane %v1763, 1
        %v1776 = vrot.slane %v1635, 1
        %v1777 = vsel %vm466, %v1775, %v1776
        %v1778 = vrot.slane %v1764, 1
        %v1779 = vrot.slane %v1636, 1
        %v1780 = vsel %vm466, %v1778, %v1779
        %v1781 = vrot.slane %v1765, 1
        %v1782 = vrot.slane %v1637, 1
        %v1783 = vsel %vm466, %v1781, %v1782
        %v1784 = vrot.slane %v1766, 1
        %v1785 = vrot.slane %v1638, 1
        %v1786 = vsel %vm466, %v1784, %v1785
        %v1787 = vrot.slane %v1767, 1
        %v1788 = vrot.slane %v1639, 1
        %v1789 = vsel %vm466, %v1787, %v1788
        %v1790 = vrot.slane %v1768, 1
        %v1791 = vrot.slane %v1640, 1
        %v1792 = vsel %vm466, %v1790, %v1791
        %v1801 = vld [vmem:[%s192 + $0x180] sm:$0xf]
        %v1802 = vld [vmem:[%s192 + $0x184] sm:$0xf]
        %v1803 = vld [vmem:[%s192 + $0x188] sm:$0xf]
        %v1804 = vld [vmem:[%s192 + $0x18c] sm:$0xf]
        %v1805 = vld [vmem:[%s192 + $0x190] sm:$0xf]
        %v1806 = vld [vmem:[%s192 + $0x194] sm:$0xf]
        %v1807 = vld [vmem:[%s192 + $0x198] sm:$0xf]
        %v1808 = vld [vmem:[%s192 + $0x19c] sm:$0xf]
        %v1809 = vld [vmem:[%s192 + $0x1a0] sm:$0xf]
        %v1810 = vld [vmem:[%s192 + $0x1a4] sm:$0xf]
        %v1811 = vld [vmem:[%s192 + $0x1a8] sm:$0xf]
        %v1812 = vld [vmem:[%s192 + $0x1ac] sm:$0xf]
        %v1813 = vld [vmem:[%s192 + $0x1b0] sm:$0xf]
        %v1814 = vld [vmem:[%s192 + $0x1b4] sm:$0xf]
        %v1815 = vld [vmem:[%s192 + $0x1b8] sm:$0xf]
        %v1816 = vld [vmem:[%s192 + $0x1bc] sm:$0xf]
        %v1817 = vld [vmem:[%s192 + $0x1c0] sm:$0xf]
        %v1818 = vld [vmem:[%s192 + $0x1c4] sm:$0xf]
        %v1819 = vld [vmem:[%s192 + $0x1c8] sm:$0xf]
        %v1820 = vld [vmem:[%s192 + $0x1cc] sm:$0xf]
        %v1821 = vld [vmem:[%s192 + $0x1d0] sm:$0xf]
        %v1822 = vld [vmem:[%s192 + $0x1d4] sm:$0xf]
        %v1823 = vld [vmem:[%s192 + $0x1d8] sm:$0xf]
        %v1824 = vld [vmem:[%s192 + $0x1dc] sm:$0xf]
        %v1825 = vld [vmem:[%s192 + $0x1e0] sm:$0xf]
        %v1826 = vld [vmem:[%s192 + $0x1e4] sm:$0xf]
        %v1827 = vld [vmem:[%s192 + $0x1e8] sm:$0xf]
        %v1828 = vld [vmem:[%s192 + $0x1ec] sm:$0xf]
        %v1829 = vld [vmem:[%s192 + $0x1f0] sm:$0xf]
        %v1830 = vld [vmem:[%s192 + $0x1f4] sm:$0xf]
        %v1831 = vld [vmem:[%s192 + $0x1f8] sm:$0xf]
        %v1832 = vld [vmem:[%s192 + $0x1fc] sm:$0xf]
        %v1833 = vld [vmem:[%s192 + $0x200] sm:$0xf]
        %v1834 = vld [vmem:[%s192 + $0x204] sm:$0xf]
        %v1835 = vld [vmem:[%s192 + $0x208] sm:$0xf]
        %v1836 = vld [vmem:[%s192 + $0x20c] sm:$0xf]
        %v1837 = vld [vmem:[%s192 + $0x210] sm:$0xf]
        %v1838 = vld [vmem:[%s192 + $0x214] sm:$0xf]
        %v1839 = vld [vmem:[%s192 + $0x218] sm:$0xf]
        %v1840 = vld [vmem:[%s192 + $0x21c] sm:$0xf]
        %v1841 = vld [vmem:[%s192 + $0x220] sm:$0xf]
        %v1842 = vld [vmem:[%s192 + $0x224] sm:$0xf]
        %v1843 = vld [vmem:[%s192 + $0x228] sm:$0xf]
        %v1844 = vld [vmem:[%s192 + $0x22c] sm:$0xf]
        %v1845 = vld [vmem:[%s192 + $0x230] sm:$0xf]
        %v1846 = vld [vmem:[%s192 + $0x234] sm:$0xf]
        %v1847 = vld [vmem:[%s192 + $0x238] sm:$0xf]
        %v1848 = vld [vmem:[%s192 + $0x23c] sm:$0xf]
        %v1897 = vunpack.c.l.b16 %v1801
        %v1898 = vunpack.c.l.b16 %v1802
        %v1899 = vunpack.c.l.b16 %v1803
        %v1900 = vunpack.c.l.b16 %v1804
        %v1901 = vunpack.c.l.b16 %v1805
        %v1902 = vunpack.c.l.b16 %v1806
        %v1903 = vunpack.c.l.b16 %v1807
        %v1904 = vunpack.c.l.b16 %v1808
        %v1905 = vunpack.c.l.b16 %v1809
        %v1906 = vunpack.c.l.b16 %v1810
        %v1907 = vunpack.c.l.b16 %v1811
        %v1908 = vunpack.c.l.b16 %v1812
        %v1909 = vunpack.c.l.b16 %v1813
        %v1910 = vunpack.c.l.b16 %v1814
        %v1911 = vunpack.c.l.b16 %v1815
        %v1912 = vunpack.c.l.b16 %v1816
        %v1913 = vunpack.c.l.b16 %v1817
        %v1914 = vunpack.c.l.b16 %v1818
        %v1915 = vunpack.c.l.b16 %v1819
        %v1916 = vunpack.c.l.b16 %v1820
        %v1917 = vunpack.c.l.b16 %v1821
        %v1918 = vunpack.c.l.b16 %v1822
        %v1919 = vunpack.c.l.b16 %v1823
        %v1920 = vunpack.c.l.b16 %v1824
        %v1921 = vunpack.c.l.b16 %v1825
        %v1922 = vunpack.c.l.b16 %v1826
        %v1923 = vunpack.c.l.b16 %v1827
        %v1924 = vunpack.c.l.b16 %v1828
        %v1925 = vunpack.c.l.b16 %v1829
        %v1926 = vunpack.c.l.b16 %v1830
        %v1927 = vunpack.c.l.b16 %v1831
        %v1928 = vunpack.c.l.b16 %v1832
        %v1929 = vunpack.c.l.b16 %v1833
        %v1930 = vunpack.c.l.b16 %v1834
        %v1931 = vunpack.c.l.b16 %v1835
        %v1932 = vunpack.c.l.b16 %v1836
        %v1933 = vunpack.c.l.b16 %v1837
        %v1934 = vunpack.c.l.b16 %v1838
        %v1935 = vunpack.c.l.b16 %v1839
        %v1936 = vunpack.c.l.b16 %v1840
        %v1937 = vunpack.c.l.b16 %v1841
        %v1938 = vunpack.c.l.b16 %v1842
        %v1939 = vunpack.c.l.b16 %v1843
        %v1940 = vunpack.c.l.b16 %v1844
        %v1941 = vunpack.c.l.b16 %v1845
        %v1942 = vunpack.c.l.b16 %v1846
        %v1943 = vunpack.c.l.b16 %v1847
        %v1944 = vunpack.c.l.b16 %v1848
        %v1945 = vpack.c.b16 %v1898, %v1897
        %v1946 = vpack.c.b16 %v1900, %v1899
        %v1947 = vpack.c.b16 %v1902, %v1901
        %v1948 = vpack.c.b16 %v1904, %v1903
        %v1949 = vpack.c.b16 %v1906, %v1905
        %v1950 = vpack.c.b16 %v1908, %v1907
        %v1951 = vpack.c.b16 %v1910, %v1909
        %v1952 = vpack.c.b16 %v1912, %v1911
        %v1953 = vpack.c.b16 %v1914, %v1913
        %v1954 = vpack.c.b16 %v1916, %v1915
        %v1955 = vpack.c.b16 %v1918, %v1917
        %v1956 = vpack.c.b16 %v1920, %v1919
        %v1957 = vpack.c.b16 %v1922, %v1921
        %v1958 = vpack.c.b16 %v1924, %v1923
        %v1959 = vpack.c.b16 %v1926, %v1925
        %v1960 = vpack.c.b16 %v1928, %v1927
        %v1961 = vpack.c.b16 %v1930, %v1929
        %v1962 = vpack.c.b16 %v1932, %v1931
        %v1963 = vpack.c.b16 %v1934, %v1933
        %v1964 = vpack.c.b16 %v1936, %v1935
        %v1965 = vpack.c.b16 %v1938, %v1937
        %v1966 = vpack.c.b16 %v1940, %v1939
        %v1967 = vpack.c.b16 %v1942, %v1941
        %v1968 = vpack.c.b16 %v1944, %v1943
        %1993 = vmatprep.subr.bf16.mxu0 0
        %1994 = vmatpush1.bf16.msra.mxu0 %v1945
        %1995 = vmatprep.subr.bf16.mxu0 0
        %1996 = vmatpush1.bf16.msra.mxu0 %v1946
        %1997 = vmatprep.subr.bf16.mxu0 0
        %1998 = vmatpush1.bf16.msra.mxu0 %v1947
        %1999 = vmatprep.subr.bf16.mxu0 0
        %2000 = vmatpush1.bf16.msra.mxu0 %v1948
        %2001 = vmatprep.subr.bf16.mxu0 0
        %2002 = vmatpush1.bf16.msra.mxu0 %v1949
        %2003 = vmatprep.subr.bf16.mxu0 0
        %2004 = vmatpush1.bf16.msra.mxu0 %v1950
        %2005 = vmatprep.subr.bf16.mxu0 0
        %2006 = vmatpush1.bf16.msra.mxu0 %v1951
        %2007 = vmatprep.subr.bf16.mxu0 0
        %2008 = vmatpush1.bf16.msra.mxu0 %v1952
        %2009 = vmatprep.subr.bf16.mxu0 0
        %2010 = vmatpush1.bf16.msra.mxu0 %v1953
        %2011 = vmatprep.subr.bf16.mxu0 0
        %2012 = vmatpush1.bf16.msra.mxu0 %v1954
        %2013 = vmatprep.subr.bf16.mxu0 0
        %2014 = vmatpush1.bf16.msra.mxu0 %v1955
        %2015 = vmatprep.subr.bf16.mxu0 0
        %2016 = vmatpush1.bf16.msra.mxu0 %v1956
        %2017 = vmatprep.subr.bf16.mxu0 0
        %2018 = vmatpush1.bf16.msra.mxu0 %v1957
        %2019 = vmatprep.subr.bf16.mxu0 0
        %2020 = vmatpush1.bf16.msra.mxu0 %v1958
        %2021 = vmatprep.subr.bf16.mxu0 0
        %2022 = vmatpush1.bf16.msra.mxu0 %v1959
        %2023 = vmatprep.subr.bf16.mxu0 0
        %2024 = vmatpush1.bf16.msra.mxu0 %v1960
        %2025 = vmatprep.mubr.bf16.mxu0 %v1652
        %2026 = vmatmul.mubr.bf16.gmra.mrb[0].mxu0 %v1601
        %v2027 = vpop.f32.mrb[0].mxu0
        %v2028 = vadd.f32 0.0, %v2027
        %v2029 = vpop.f32.mrb[0].mxu0
        %v2030 = vpop.f32.mrb[0].mxu0
        %v2031 = vadd.f32 0.0, %v2030
        %v2032 = vpop.f32.mrb[0].mxu0
        %2033 = vmatprep.mubr.bf16.mxu0 %v1664
        %2034 = vmatmul.mubr.bf16.gmra.mrb[0].mxu0 %v1602
        %v2035 = vpop.f32.mrb[0].mxu0
        %v2036 = vadd.f32 0.0, %v2035
        %v2037 = vpop.f32.mrb[0].mxu0
        %v2038 = vpop.f32.mrb[0].mxu0
        %v2039 = vadd.f32 0.0, %v2038
        %v2040 = vpop.f32.mrb[0].mxu0
        %2041 = vmatprep.mubr.bf16.mxu0 %v1676
        %2042 = vmatmul.mubr.bf16.gmra.mrb[0].mxu0 %v1603
        %v2043 = vpop.f32.mrb[0].mxu0
        %v2044 = vadd.f32 0.0, %v2043
        %v2045 = vpop.f32.mrb[0].mxu0
        %v2046 = vpop.f32.mrb[0].mxu0
        %v2047 = vadd.f32 0.0, %v2046
        %v2048 = vpop.f32.mrb[0].mxu0
        %2049 = vmatprep.mubr.bf16.mxu0 %v1688
        %2050 = vmatmul.mubr.bf16.gmra.mrb[0].mxu0 %v1604
        %v2051 = vpop.f32.mrb[0].mxu0
        %v2052 = vadd.f32 0.0, %v2051
        %v2053 = vpop.f32.mrb[0].mxu0
        %v2054 = vpop.f32.mrb[0].mxu0
        %v2055 = vadd.f32 0.0, %v2054
        %v2056 = vpop.f32.mrb[0].mxu0
        %2057 = vmatprep.mubr.bf16.mxu0 %v1700
        %2058 = vmatmul.mubr.bf16.gmra.mrb[0].mxu0 %v1605
        %v2059 = vpop.f32.mrb[0].mxu0
        %v2060 = vadd.f32 0.0, %v2059
        %v2061 = vpop.f32.mrb[0].mxu0
        %v2062 = vpop.f32.mrb[0].mxu0
        %v2063 = vadd.f32 0.0, %v2062
        %v2064 = vpop.f32.mrb[0].mxu0
        %2065 = vmatprep.mubr.bf16.mxu0 %v1712
        %2066 = vmatmul.mubr.bf16.gmra.mrb[0].mxu0 %v1606
        %v2067 = vpop.f32.mrb[0].mxu0
        %v2068 = vadd.f32 0.0, %v2067
        %v2069 = vpop.f32.mrb[0].mxu0
        %v2070 = vpop.f32.mrb[0].mxu0
        %v2071 = vadd.f32 0.0, %v2070
        %v2072 = vpop.f32.mrb[0].mxu0
        %2073 = vmatprep.mubr.bf16.mxu0 %v1724
        %2074 = vmatmul.mubr.bf16.gmra.mrb[0].mxu0 %v1607
        %v2075 = vpop.f32.mrb[0].mxu0
        %v2076 = vadd.f32 0.0, %v2075
        %v2077 = vpop.f32.mrb[0].mxu0
        %v2078 = vpop.f32.mrb[0].mxu0
        %v2079 = vadd.f32 0.0, %v2078
        %v2080 = vpop.f32.mrb[0].mxu0
        %2081 = vmatprep.mubr.bf16.mxu0 %v1736
        %2082 = vmatmul.mubr.bf16.gmra.mrb[0].mxu0 %v1608
        %v2083 = vpop.f32.mrb[0].mxu0
        %v2084 = vadd.f32 0.0, %v2083
        %v2085 = vpop.f32.mrb[0].mxu0
        %v2086 = vpop.f32.mrb[0].mxu0
        %v2087 = vadd.f32 0.0, %v2086
        %v2088 = vpop.f32.mrb[0].mxu0
        %2089 = vdwg.mxu0
        %2090 = vmatprep.subr.bf16.mxu0 0
        %2091 = vmatpush1.bf16.msra.mxu0 %v1961
        %2092 = vmatprep.subr.bf16.mxu0 0
        %2093 = vmatpush1.bf16.msra.mxu0 %v1962
        %2094 = vmatprep.subr.bf16.mxu0 0
        %2095 = vmatpush1.bf16.msra.mxu0 %v1963
        %2096 = vmatprep.subr.bf16.mxu0 0
        %2097 = vmatpush1.bf16.msra.mxu0 %v1964
        %2098 = vmatprep.subr.bf16.mxu0 0
        %2099 = vmatpush1.bf16.msra.mxu0 %v1965
        %2100 = vmatprep.subr.bf16.mxu0 0
        %2101 = vmatpush1.bf16.msra.mxu0 %v1966
        %2102 = vmatprep.subr.bf16.mxu0 0
        %2103 = vmatpush1.bf16.msra.mxu0 %v1967
        %2104 = vmatprep.subr.bf16.mxu0 0
        %2105 = vmatpush1.bf16.msra.mxu0 %v1968
        %2106 = vmatprep.subr.bf16.mxu0 0
        %2107 = vmatpush1.bf16.msra.mxu0 0
        %2108 = vmatprep.subr.bf16.mxu0 0
        %2109 = vmatpush1.bf16.msra.mxu0 0
        %2110 = vmatprep.subr.bf16.mxu0 0
        %2111 = vmatpush1.bf16.msra.mxu0 0
        %2112 = vmatprep.subr.bf16.mxu0 0
        %2113 = vmatpush1.bf16.msra.mxu0 0
        %2114 = vmatprep.subr.bf16.mxu0 0
        %2115 = vmatpush1.bf16.msra.mxu0 0
        %2116 = vmatprep.subr.bf16.mxu0 0
        %2117 = vmatpush1.bf16.msra.mxu0 0
        %2118 = vmatprep.subr.bf16.mxu0 0
        %2119 = vmatpush1.bf16.msra.mxu0 0
        %2120 = vmatprep.subr.bf16.mxu0 0
        %2121 = vmatpush1.bf16.msra.mxu0 0
        %2122 = vmatprep.mubr.bf16.mxu0 0
        %2123 = vmatmul.mubr.bf16.gmra.mrb[0].mxu0 %v1771
        %v2124 = vpop.f32.mrb[0].mxu0
        %v2125 = vadd.f32 %v2028, %v2124
        %v2126 = vpop.f32.mrb[0].mxu0
        %v2127 = vpop.f32.mrb[0].mxu0
        %v2128 = vadd.f32 %v2031, %v2127
        %v2129 = vpop.f32.mrb[0].mxu0
        %2130 = vmatprep.mubr.bf16.mxu0 0
        %2131 = vmatmul.mubr.bf16.gmra.mrb[0].mxu0 %v1774
        %v2132 = vpop.f32.mrb[0].mxu0
        %v2133 = vadd.f32 %v2036, %v2132
        %v2134 = vpop.f32.mrb[0].mxu0
        %v2135 = vpop.f32.mrb[0].mxu0
        %v2136 = vadd.f32 %v2039, %v2135
        %v2137 = vpop.f32.mrb[0].mxu0
        %2138 = vmatprep.mubr.bf16.mxu0 0
        %2139 = vmatmul.mubr.bf16.gmra.mrb[0].mxu0 %v1777
        %v2140 = vpop.f32.mrb[0].mxu0
        %v2141 = vadd.f32 %v2044, %v2140
        %v2142 = vpop.f32.mrb[0].mxu0
        %v2143 = vpop.f32.mrb[0].mxu0
        %v2144 = vadd.f32 %v2047, %v2143
        %v2145 = vpop.f32.mrb[0].mxu0
        %2146 = vmatprep.mubr.bf16.mxu0 0
        %2147 = vmatmul.mubr.bf16.gmra.mrb[0].mxu0 %v1780
        %v2148 = vpop.f32.mrb[0].mxu0
        %v2149 = vadd.f32 %v2052, %v2148
        %v2150 = vpop.f32.mrb[0].mxu0
        %v2151 = vpop.f32.mrb[0].mxu0
        %v2152 = vadd.f32 %v2055, %v2151
        %v2153 = vpop.f32.mrb[0].mxu0
        %2154 = vmatprep.mubr.bf16.mxu0 0
        %2155 = vmatmul.mubr.bf16.gmra.mrb[0].mxu0 %v1783
        %v2156 = vpop.f32.mrb[0].mxu0
        %v2157 = vadd.f32 %v2060, %v2156
        %v2158 = vpop.f32.mrb[0].mxu0
        %v2159 = vpop.f32.mrb[0].mxu0
        %v2160 = vadd.f32 %v2063, %v2159
        %v2161 = vpop.f32.mrb[0].mxu0
        %2162 = vmatprep.mubr.bf16.mxu0 0
        %2163 = vmatmul.mubr.bf16.gmra.mrb[0].mxu0 %v1786
        %v2164 = vpop.f32.mrb[0].mxu0
        %v2165 = vadd.f32 %v2068, %v2164
        %v2166 = vpop.f32.mrb[0].mxu0
        %v2167 = vpop.f32.mrb[0].mxu0
        %v2168 = vadd.f32 %v2071, %v2167
        %v2169 = vpop.f32.mrb[0].mxu0
        %2170 = vmatprep.mubr.bf16.mxu0 0
        %2171 = vmatmul.mubr.bf16.gmra.mrb[0].mxu0 %v1789
        %v2172 = vpop.f32.mrb[0].mxu0
        %v2173 = vadd.f32 %v2076, %v2172
        %v2174 = vpop.f32.mrb[0].mxu0
        %v2175 = vpop.f32.mrb[0].mxu0
        %v2176 = vadd.f32 %v2079, %v2175
        %v2177 = vpop.f32.mrb[0].mxu0
        %2178 = vmatprep.mubr.bf16.mxu0 0
        %2179 = vmatmul.mubr.bf16.gmra.mrb[0].mxu0 %v1792
        %v2180 = vpop.f32.mrb[0].mxu0
        %v2181 = vadd.f32 %v2084, %v2180
        %v2182 = vpop.f32.mrb[0].mxu0
        %v2183 = vpop.f32.mrb[0].mxu0
        %v2184 = vadd.f32 %v2087, %v2183
        %v2185 = vpop.f32.mrb[0].mxu0
        %2186 = vdwg.mxu0
        %v2187 = vadd.f32 %v1474, %v2125
        %v2188 = vadd.f32 %v1477, %v2128
        %v2189 = vadd.f32 %v1482, %v2133
        %v2190 = vadd.f32 %v1485, %v2136
        %v2191 = vadd.f32 %v1490, %v2141
        %v2192 = vadd.f32 %v1493, %v2144
        %v2193 = vadd.f32 %v1498, %v2149
        %v2194 = vadd.f32 %v1501, %v2152
        %v2195 = vadd.f32 %v1506, %v2157
        %v2196 = vadd.f32 %v1509, %v2160
        %v2197 = vadd.f32 %v1514, %v2165
        %v2198 = vadd.f32 %v1517, %v2168
        %v2199 = vadd.f32 %v1522, %v2173
        %v2200 = vadd.f32 %v1525, %v2176
        %v2201 = vadd.f32 %v1530, %v2181
        %v2202 = vadd.f32 %v1533, %v2184
        %2203 = vst [vmem:[%s221] sm:$0xff] %v2187
        %2204 = vst [vmem:[%s221 + $0x8] sm:$0xff] %v2188
        %2205 = vst [vmem:[%s221 + $0x10] sm:$0xff] %v2189
        %2206 = vst [vmem:[%s221 + $0x18] sm:$0xff] %v2190
        %2207 = vst [vmem:[%s221 + $0x20] sm:$0xff] %v2191
        %2208 = vst [vmem:[%s221 + $0x28] sm:$0xff] %v2192
        %2209 = vst [vmem:[%s221 + $0x30] sm:$0xff] %v2193
        %2210 = vst [vmem:[%s221 + $0x38] sm:$0xff] %v2194
        %2211 = vst [vmem:[%s221 + $0x40] sm:$0xff] %v2195
        %2212 = vst [vmem:[%s221 + $0x48] sm:$0xff] %v2196
        %2213 = vst [vmem:[%s221 + $0x50] sm:$0xff] %v2197
        %2214 = vst [vmem:[%s221 + $0x58] sm:$0xff] %v2198
        %2215 = vst [vmem:[%s221 + $0x60] sm:$0xff] %v2199
        %2216 = vst [vmem:[%s221 + $0x68] sm:$0xff] %v2200
        %2217 = vst [vmem:[%s221 + $0x70] sm:$0xff] %v2201
        %2218 = vst [vmem:[%s221 + $0x78] sm:$0xff] %v2202
        %s2219 = sand.u32 %s115, 1
        %s2220 = scalar_lea.sflag [#allocation4], %s2219
        %s2221 = sand.u32 %s115, 1
        %s2222 = smul.addr %s2221, 128
        %s2223 = scalar_lea.vmem [#allocation5], %s2222
        // Predicated region
        $region33: #{tpu_custom_call.1} parent=27 // pred_check
          %p2224 = pneg %p125
        $region34: #{tpu_custom_call.1} parent=27 // pred_check_branch
          %2226 = sbr.rel (%p2224) target = $region36
        $region35: #{tpu_custom_call.1} parent=27 // pred_region
          %s2227 = smul.u32 8, %s27
          %s2229 = ssub.s32 2048, 2048
          %2230 = vsyncadd %s2220, %s2229
          %s2231 = smul.addr %s2227, 2
          %s2232 = sadd.s32 %s28, %s2231
          %s2233 = smul.addr %s26, 32
          %s2234 = sadd.s32 %s2232, %s2233
          %s2235 = smul.addr %s25, 256
          %s2236 = sadd.s32 %s2234, %s2235
          %s2237 = smul.addr %s2236, 128
          %s2238 = scalar_lea.hbm %s2, %s2237
          %s2239 = sshll.u32 %s2223, 4
          %s2240 = int_to_ptr.vmem [resolvable:$true] %s2239
          %2245 = dma.vmem_to_hbm [thread:$0]  %s2240, 2048, %s2238, %s2220, 128, 128, 8
        $region36: #{tpu_custom_call.1} parent=27 // pred_fallthru
          _
      $region28: #{tpu_custom_call.1} parent=5 // pred_fallthru
        _
      %p2246 = scmp.le.s32.totalorder 2, %s14
      // Predicated region
      $region37: #{tpu_custom_call.1} parent=5 // pred_check
        %p2247 = pneg %p2246
      $region38: #{tpu_custom_call.1} parent=5 // pred_check_branch
        %2249 = sbr.rel (%p2247) target = $region40
      $region39: #{tpu_custom_call.1} parent=5 // pred_region
        %s2250 = ssub.s32 %s14, 2
        // Predicated region
        $region41: #{tpu_custom_call.1} parent=39 // pred_check
          %p2251 = pneg %p131
        $region42: #{tpu_custom_call.1} parent=39 // pred_check_branch
          %2253 = sbr.rel (%p2251) target = $region44
        $region43: #{tpu_custom_call.1} parent=39 // pred_region
          %s2254 = sand.u32 %s116, 1
          %s2255 = scalar_lea.sflag [#allocation4], %s2254
          %s2256 = sand.u32 %s116, 1
          %s2257 = smul.addr %s2256, 128
          %s2258 = scalar_lea.vmem [#allocation5], %s2257
          %2259 = dma.done %s2255, 2048
        $region44: #{tpu_custom_call.1} parent=39 // pred_fallthru
          _
      $region40: #{tpu_custom_call.1} parent=5 // pred_fallthru
        _
    $region6: #{tpu_custom_call.1} parent=1 // loop_footer
      %s18 = sadd.s32 1, %s14
    $region7: #{tpu_custom_call.1} parent=1 // loop_footer_branch
      %13 = sbr.rel target = $region3
    $region8: #{tpu_custom_call.1} parent=1 // loop_exit
      _
    %2260 = vsyncpa [#allocation3], 1
    %s2261 = scalar_lea.sflag [#allocation3], 1
    %2262 = vsyncpa %s2261, 1
    %2263 = vsyncpa [#allocation4], 1
    %s2264 = scalar_lea.sflag [#allocation4], 1
    %2265 = vsyncpa %s2264, 1

</llo_original>
